<compile_context>
chip_gen: v7x
topology: tpu7x:2x2x1
jax: 0.10.0
libtpu: 0.0.40
codegen_flags: <defaults>
</compile_context>

<pallas_src>
import math

import jax
import jax.numpy as jnp
import numpy as np
from jax.experimental import pallas as pl
from jax.experimental.pallas import tpu as pltpu

_LANE = 128                 # TPU lane width: feature dims padded to multiples of this.
_SUBLANE = 8                # f32 sublane granularity (transposed output row padding).
_LOG2 = math.log(2.0)
_VMEM_BUDGET = 40 * 2**20   # conservative per-kernel VMEM budget (v7x has 64 MiB total).


def _round_up(x: int, m: int) -> int:
    return ((x + m - 1) // m) * m


def _ssp(x):
    # Shifted softplus: softplus(x) - log(2)  (orb_models "ssp" activation), in f32.
    return jnp.logaddexp(x, 0.0) - _LOG2


def _make_mlp_kernel(num_hidden_layers: int, compute_dtype, out_sub: int):
    """Kernel over one node tile: [Linear -> SSP] * num_hidden_layers, then Linear.

    Writes the transposed (out_sub, TILE_N) force block (lane-dense output stores).
    """

    def kernel(*refs):
        # refs layout: x, (w_h, b_h) * num_hidden_layers, w_out, b_out, out
        x_ref = refs[0]
        out_ref = refs[-1]

        h = x_ref[...].astype(jnp.float32)          # f32 tile straight from HBM (no pre-cast pass)
        idx = 1
        for _ in range(num_hidden_layers):
            w_ref, b_ref = refs[idx], refs[idx + 1]
            idx += 2
            # Only the dot operand is cast; h itself stays f32 between layers.
            z = jnp.dot(h.astype(compute_dtype), w_ref[...],
                        preferred_element_type=jnp.float32) + b_ref[...]
            h = _ssp(z)                             # SSP and carried activation in f32
        w_ref, b_ref = refs[idx], refs[idx + 1]
        pred = jnp.dot(h.astype(compute_dtype), w_ref[...],
                       preferred_element_type=jnp.float32) + b_ref[...]   # (TILE_N, 128) f32
        pred_t = pred.T                              # (128, TILE_N): XLU transpose (idle slot)
        out_ref[...] = pred_t[:out_sub, :].astype(out_ref.dtype)          # (8, TILE_N) lane-dense

    return kernel


def force_head_forward(node_features, params, n_node, *, tile_n=1024,
                       compute_dtype=jnp.bfloat16):
    """ForceHead forward: fused Pallas MLP over node tiles + wrapper-side mean removal.

    node_features: [N, latent_dim] float32
    params: list of (W [in,out], b [1,out] or [out]) pairs; last pair is the output layer.
    n_node: [G] int32 number of nodes per graph (sum == N).
    compute_dtype: dtype of the matmul operands (bf16 recommended on v5e/v6e/v7x;
                   float32 for exactness checks).  Accumulation is always f32.
    """
    n_total, latent_dim = node_features.shape
    output_size = params[-1][0].shape[1]
    num_hidden_layers = len(params) - 1

    # ---- Pad feature dims to lane multiples; cast matmul weights (biases stay f32). ----
    padded = []
    for w, b in params:
        b = jnp.reshape(b, (1, -1))
        fin, fout = w.shape
        fin_p, fout_p = _round_up(fin, _LANE), _round_up(fout, _LANE)
        w_p = jnp.zeros((fin_p, fout_p), compute_dtype).at[:fin, :fout].set(
            w.astype(compute_dtype))
        b_p = jnp.zeros((1, fout_p), jnp.float32).at[:, :fout].set(b.astype(jnp.float32))
        padded.append((w_p, b_p))
    latent_pad = padded[0][0].shape[0]
    out_sub = min(_round_up(output_size, _SUBLANE), padded[-1][0].shape[1])

    # ---- Tile selection: big tiles (fewer grid steps), budgeted for v7x's 64 MiB VMEM. ----
    def _vmem_estimate(tn):
        in_buf = 2 * tn * latent_pad * 4                       # f32 input tile, double-buffered
        out_buf = 2 * out_sub * tn * 4                         # transposed f32 output, 2 bufs
        wide = max([latent_pad] + [w.shape[1] for w, _ in padded])
        interm = 4 * tn * wide * 4                             # live f32 h / z / pred / transpose
        weights = 2 * sum(w.size * w.dtype.itemsize + b.size * 4 for w, b in padded)
        return in_buf + out_buf + interm + weights

    # tile_n must be a multiple of 128 (it is the lane dim of the transposed output block).
    tile_n = max(_LANE, _round_up(min(tile_n, _round_up(n_total, _LANE)), _LANE))
    while tile_n > _LANE and _vmem_estimate(tile_n) > _VMEM_BUDGET:
        tile_n = max(_LANE, ((tile_n // 2) // _LANE) * _LANE)
    # v7x megacore: keep grid length >= 2 (ideally even) so both TensorCores get work.
    while tile_n > _LANE and _round_up(n_total, tile_n) // tile_n < 2:
        tile_n = max(_LANE, ((tile_n // 2) // _LANE) * _LANE)
    n_pad = _round_up(n_total, tile_n)

    vmem_limit = int(min(48 * 2**20, max(32 * 2**20, 2 * _vmem_estimate(tile_n))))

    # ---- Node features stay f32; pad only when shapes require it (else zero-copy). ----
    if latent_pad != latent_dim or n_pad != n_total:
        x_in = jnp.zeros((n_pad, latent_pad), jnp.float32).at[:n_total, :latent_dim].set(
            node_features.astype(jnp.float32))
    else:
        x_in = node_features.astype(jnp.float32)

    flat_params = []
    for w_p, b_p in padded:
        flat_params.extend([w_p, b_p])

    kernel = _make_mlp_kernel(num_hidden_layers, compute_dtype, out_sub)

    def _run(single_buffer_weights):
        in_specs = [pl.BlockSpec((tile_n, latent_pad), lambda i: (i, 0))]
        for w_p, b_p in padded:
            if single_buffer_weights:
                # Grid-invariant blocks: double-buffering them only wastes VMEM.
                in_specs.append(pl.BlockSpec(w_p.shape, lambda i: (0, 0),
                                             pipeline_mode=pl.Buffered(1)))
                in_specs.append(pl.BlockSpec(b_p.shape, lambda i: (0, 0),
                                             pipeline_mode=pl.Buffered(1)))
            else:
                in_specs.append(pl.BlockSpec(w_p.shape, lambda i: (0, 0)))
                in_specs.append(pl.BlockSpec(b_p.shape, lambda i: (0, 0)))
        return pl.pallas_call(
            kernel,
            out_shape=jax.ShapeDtypeStruct((out_sub, n_pad), jnp.float32),
            grid=(n_pad // tile_n,),
            in_specs=in_specs,
            out_specs=pl.BlockSpec((out_sub, tile_n), lambda i: (0, i)),
            compiler_params=pltpu.CompilerParams(
                dimension_semantics=("parallel",),
                vmem_limit_bytes=vmem_limit),
        )(x_in, *flat_params)

    try:
        pred_pad = _run(True)
    except Exception:
        # pipeline_mode / Buffered(1) not supported by this JAX version: default buffering.
        pred_pad = _run(False)

    # Transposed output: rows are force components, columns are nodes.
    pred = pred_pad[:output_size, :n_total].T                                   # [N, 3]

    # ---- remove_mean: per-graph mean subtraction (memory-bound [N,3] op; plain JAX). ----
    num_graphs = n_node.shape[0]
    graph_ids = jnp.repeat(jnp.arange(num_graphs), n_node, total_repeat_length=n_total)
    sums = jax.ops.segment_sum(pred, graph_ids, num_segments=num_graphs)        # [G, 3]
    counts = jnp.maximum(n_node, 1).astype(jnp.float32)[:, None]                # 0-node guard
    pred = pred - (sums / counts)[graph_ids]

    # TODO(synk): remove_torque_for_nonpbc_systems requires batch positions / pbc flags
    #             and a per-system 3x3 inertia-tensor solve; not implemented here.
    return pred


def init_force_head_params(key, latent_dim, num_mlp_layers, mlp_hidden_dim, output_size=3):
    """Deterministic PyTorch-Linear-style init (uniform(-1/sqrt(fan_in), 1/sqrt(fan_in)))."""
    sizes = [latent_dim] + [mlp_hidden_dim] * num_mlp_layers + [output_size]
    params = []
    for fan_in, fan_out in zip(sizes[:-1], sizes[1:]):
        key, kw, kb = jax.random.split(key, 3)
        bound = 1.0 / math.sqrt(fan_in)
        w = jax.random.uniform(kw, (fan_in, fan_out), jnp.float32, -bound, bound)
        b = jax.random.uniform(kb, (1, fan_out), jnp.float32, -bound, bound)
        params.append((w, b))
    return params


def force_head_reference(node_features, params, n_node):
    """Pure-JAX f32 reference for correctness checking."""
    h = node_features
    for w, b in params[:-1]:
        h = _ssp(h @ w + b)
    w_out, b_out = params[-1]
    pred = h @ w_out + b_out
    num_graphs = n_node.shape[0]
    graph_ids = jnp.repeat(
        jnp.arange(num_graphs), n_node, total_repeat_length=node_features.shape[0])
    sums = jax.ops.segment_sum(pred, graph_ids, num_segments=num_graphs)
    means = sums / jnp.maximum(n_node, 1).astype(jnp.float32)[:, None]
    return pred - means[graph_ids]


if __name__ == "__main__":
    # Small, ForceHead-consistent shapes.
    latent_dim = 32
    num_mlp_layers = 2
    mlp_hidden_dim = 32
    output_size = 3
    n_node = jnp.array([7, 9], dtype=jnp.int32)   # 2 graphs, 16 atoms total
    n_total = int(n_node.sum())

    key = jax.random.PRNGKey(0)
    key, k_feat = jax.random.split(key)
    node_features = jax.random.normal(k_feat, (n_total, latent_dim), jnp.float32)
    params = init_force_head_params(
        key, latent_dim, num_mlp_layers, mlp_hidden_dim, output_size)

    ref = force_head_reference(node_features, params, n_node)

    # Exactness check: f32 compute path.
    out_f32 = jax.block_until_ready(
        force_head_forward(node_features, params, n_node, compute_dtype=jnp.float32))
    assert out_f32.shape == (n_total, output_size)
    np.testing.assert_allclose(np.asarray(out_f32), np.asarray(ref), rtol=1e-4, atol=1e-4)

    # Performance path: bf16 matmul operands, f32 activations + accumulation (all chips).
    out_bf16 = jax.block_until_ready(
        force_head_forward(node_features, params, n_node, compute_dtype=jnp.bfloat16))
    assert out_bf16.shape == (n_total, output_size)
    np.testing.assert_allclose(np.asarray(out_bf16), np.asarray(ref), rtol=3e-2, atol=3e-2)

    print("KERNEL_OK")
</pallas_src>

<mosaic_0001>
module attributes {stable_mosaic.version = 11 : i64} {
  func.func @kernel(%arg0: i32, %arg1: memref<128x128xf32, #tpu.memory_space<vmem>>, %arg2: memref<128x128xf32, #tpu.memory_space<vmem>>, %arg3: memref<1x128xf32, #tpu.memory_space<vmem>>, %arg4: memref<128x128xf32, #tpu.memory_space<vmem>>, %arg5: memref<1x128xf32, #tpu.memory_space<vmem>>, %arg6: memref<128x128xf32, #tpu.memory_space<vmem>>, %arg7: memref<1x128xf32, #tpu.memory_space<vmem>>, %arg8: memref<8x128xf32, #tpu.memory_space<vmem>>) attributes {dimension_semantics = [#tpu.dimension_semantics<parallel>], iteration_bounds = array<i64: 1>, scalar_prefetch = 0 : i64, scratch_operands = 0 : i64, tpu.core_type = #tpu.core_type<tc>, window_params = [{transform_indices = @transform_0, window_bounds = array<i64: 128, 128>}, {pipeline_mode = #tpu.pipeline_mode<synchronous>, transform_indices = @transform_1, window_bounds = array<i64: 128, 128>}, {pipeline_mode = #tpu.pipeline_mode<synchronous>, transform_indices = @transform_2, window_bounds = array<i64: 1, 128>}, {pipeline_mode = #tpu.pipeline_mode<synchronous>, transform_indices = @transform_3, window_bounds = array<i64: 128, 128>}, {pipeline_mode = #tpu.pipeline_mode<synchronous>, transform_indices = @transform_4, window_bounds = array<i64: 1, 128>}, {pipeline_mode = #tpu.pipeline_mode<synchronous>, transform_indices = @transform_5, window_bounds = array<i64: 128, 128>}, {pipeline_mode = #tpu.pipeline_mode<synchronous>, transform_indices = @transform_6, window_bounds = array<i64: 1, 128>}, {transform_indices = @transform_7, window_bounds = array<i64: 8, 128>}]} {
    %c0 = arith.constant 0 : index
    %c0_0 = arith.constant 0 : index
    %0 = vector.load %arg1[%c0, %c0_0] : memref<128x128xf32, #tpu.memory_space<vmem>>, vector<128x128xf32>
    %c0_1 = arith.constant 0 : index
    %c0_2 = arith.constant 0 : index
    %1 = vector.load %arg2[%c0_1, %c0_2] : memref<128x128xf32, #tpu.memory_space<vmem>>, vector<128x128xf32>
    %cst = arith.constant dense<0.000000e+00> : vector<128x128xf32>
    %2 = tpu.matmul %0, %1, %cst {dimension_numbers = #tpu.dot_dimension_numbers<[1], [0], [0], [1], [0, 0, 1, 1], [], []>} : vector<128x128xf32>, vector<128x128xf32>, vector<128x128xf32> -> vector<128x128xf32>
    %c0_3 = arith.constant 0 : index
    %c0_4 = arith.constant 0 : index
    %3 = vector.load %arg3[%c0_3, %c0_4] : memref<1x128xf32, #tpu.memory_space<vmem>>, vector<1x128xf32>
    %4 = vector.broadcast %3 : vector<1x128xf32> to vector<128x128xf32>
    %5 = arith.addf %2, %4 : vector<128x128xf32>
    %cst_5 = arith.constant 0.000000e+00 : f32
    %6 = vector.broadcast %cst_5 : f32 to vector<128x128xf32>
    %7 = arith.maximumf %5, %6 : vector<128x128xf32>
    %8 = vector.broadcast %cst_5 : f32 to vector<128x128xf32>
    %9 = arith.subf %5, %8 : vector<128x128xf32>
    %10 = arith.cmpf one, %9, %9 : vector<128x128xf32>
    %11 = vector.broadcast %cst_5 : f32 to vector<128x128xf32>
    %12 = arith.addf %5, %11 : vector<128x128xf32>
    %13 = math.absf %9 : vector<128x128xf32>
    %cst_6 = arith.constant 0.000000e+00 : f32
    %14 = vector.broadcast %cst_6 : f32 to vector<128x128xf32>
    %15 = arith.subf %14, %13 : vector<128x128xf32>
    %16 = math.exp %15 : vector<128x128xf32>
    %17 = math.log1p %16 : vector<128x128xf32>
    %18 = arith.addf %7, %17 : vector<128x128xf32>
    %19 = arith.select %10, %12, %18 : vector<128x128xi1>, vector<128x128xf32>
    %cst_7 = arith.constant 0.693147182 : f32
    %20 = vector.broadcast %cst_7 : f32 to vector<128x128xf32>
    %21 = arith.subf %19, %20 : vector<128x128xf32>
    %c0_8 = arith.constant 0 : index
    %c0_9 = arith.constant 0 : index
    %22 = vector.load %arg4[%c0_8, %c0_9] : memref<128x128xf32, #tpu.memory_space<vmem>>, vector<128x128xf32>
    %cst_10 = arith.constant dense<0.000000e+00> : vector<128x128xf32>
    %23 = tpu.matmul %21, %22, %cst_10 {dimension_numbers = #tpu.dot_dimension_numbers<[1], [0], [0], [1], [0, 0, 1, 1], [], []>} : vector<128x128xf32>, vector<128x128xf32>, vector<128x128xf32> -> vector<128x128xf32>
    %c0_11 = arith.constant 0 : index
    %c0_12 = arith.constant 0 : index
    %24 = vector.load %arg5[%c0_11, %c0_12] : memref<1x128xf32, #tpu.memory_space<vmem>>, vector<1x128xf32>
    %25 = vector.broadcast %24 : vector<1x128xf32> to vector<128x128xf32>
    %26 = arith.addf %23, %25 : vector<128x128xf32>
    %cst_13 = arith.constant 0.000000e+00 : f32
    %27 = vector.broadcast %cst_13 : f32 to vector<128x128xf32>
    %28 = arith.maximumf %26, %27 : vector<128x128xf32>
    %29 = vector.broadcast %cst_13 : f32 to vector<128x128xf32>
    %30 = arith.subf %26, %29 : vector<128x128xf32>
    %31 = arith.cmpf one, %30, %30 : vector<128x128xf32>
    %32 = vector.broadcast %cst_13 : f32 to vector<128x128xf32>
    %33 = arith.addf %26, %32 : vector<128x128xf32>
    %34 = math.absf %30 : vector<128x128xf32>
    %cst_14 = arith.constant 0.000000e+00 : f32
    %35 = vector.broadcast %cst_14 : f32 to vector<128x128xf32>
    %36 = arith.subf %35, %34 : vector<128x128xf32>
    %37 = math.exp %36 : vector<128x128xf32>
    %38 = math.log1p %37 : vector<128x128xf32>
    %39 = arith.addf %28, %38 : vector<128x128xf32>
    %40 = arith.select %31, %33, %39 : vector<128x128xi1>, vector<128x128xf32>
    %cst_15 = arith.constant 0.693147182 : f32
    %41 = vector.broadcast %cst_15 : f32 to vector<128x128xf32>
    %42 = arith.subf %40, %41 : vector<128x128xf32>
    %c0_16 = arith.constant 0 : index
    %c0_17 = arith.constant 0 : index
    %43 = vector.load %arg6[%c0_16, %c0_17] : memref<128x128xf32, #tpu.memory_space<vmem>>, vector<128x128xf32>
    %cst_18 = arith.constant dense<0.000000e+00> : vector<128x128xf32>
    %44 = tpu.matmul %42, %43, %cst_18 {dimension_numbers = #tpu.dot_dimension_numbers<[1], [0], [0], [1], [0, 0, 1, 1], [], []>} : vector<128x128xf32>, vector<128x128xf32>, vector<128x128xf32> -> vector<128x128xf32>
    %c0_19 = arith.constant 0 : index
    %c0_20 = arith.constant 0 : index
    %45 = vector.load %arg7[%c0_19, %c0_20] : memref<1x128xf32, #tpu.memory_space<vmem>>, vector<1x128xf32>
    %46 = vector.broadcast %45 : vector<1x128xf32> to vector<128x128xf32>
    %47 = arith.addf %44, %46 : vector<128x128xf32>
    %48 = tpu.transpose %47, [1, 0] : vector<128x128xf32> -> vector<128x128xf32>
    %49 = vector.extract_strided_slice %48 {offsets = [0, 0], sizes = [8, 128], strides = [1, 1]} : vector<128x128xf32> to vector<8x128xf32>
    %c0_21 = arith.constant 0 : index
    %c0_22 = arith.constant 0 : index
    %50 = vector.load %arg8[%c0_21, %c0_22] : memref<8x128xf32, #tpu.memory_space<vmem>>, vector<8x128xf32>
    tpu.vector_store %arg8[%c0_21, %c0_22], %49 {strides = array<i32>} : memref<8x128xf32, #tpu.memory_space<vmem>>, vector<8x128xf32>,
    return
  }
  func.func @transform_0(%arg0: i32) -> (i32, i32) {
    %c0_i32 = arith.constant 0 : i32
    %c0_i32_0 = arith.constant 0 : i32
    return %arg0, %c0_i32 : i32, i32
  }
  func.func @transform_1(%arg0: i32) -> (i32, i32) {
    %c0_i32 = arith.constant 0 : i32
    %c0_i32_0 = arith.constant 0 : i32
    %c0_i32_1 = arith.constant 0 : i32
    return %c0_i32, %c0_i32_0 : i32, i32
  }
  func.func @transform_2(%arg0: i32) -> (i32, i32) {
    %c0_i32 = arith.constant 0 : i32
    %c0_i32_0 = arith.constant 0 : i32
    %c0_i32_1 = arith.constant 0 : i32
    return %c0_i32, %c0_i32_0 : i32, i32
  }
  func.func @transform_3(%arg0: i32) -> (i32, i32) {
    %c0_i32 = arith.constant 0 : i32
    %c0_i32_0 = arith.constant 0 : i32
    %c0_i32_1 = arith.constant 0 : i32
    return %c0_i32, %c0_i32_0 : i32, i32
  }
  func.func @transform_4(%arg0: i32) -> (i32, i32) {
    %c0_i32 = arith.constant 0 : i32
    %c0_i32_0 = arith.constant 0 : i32
    %c0_i32_1 = arith.constant 0 : i32
    return %c0_i32, %c0_i32_0 : i32, i32
  }
  func.func @transform_5(%arg0: i32) -> (i32, i32) {
    %c0_i32 = arith.constant 0 : i32
    %c0_i32_0 = arith.constant 0 : i32
    %c0_i32_1 = arith.constant 0 : i32
    return %c0_i32, %c0_i32_0 : i32, i32
  }
  func.func @transform_6(%arg0: i32) -> (i32, i32) {
    %c0_i32 = arith.constant 0 : i32
    %c0_i32_0 = arith.constant 0 : i32
    %c0_i32_1 = arith.constant 0 : i32
    return %c0_i32, %c0_i32_0 : i32, i32
  }
  func.func @transform_7(%arg0: i32) -> (i32, i32) {
    %c0_i32 = arith.constant 0 : i32
    %c0_i32_0 = arith.constant 0 : i32
    return %c0_i32, %arg0 : i32, i32
  }
}

module attributes {stable_mosaic.version = 11 : i64} {
  func.func @kernel(%arg0: i32, %arg1: memref<128x128xf32, #tpu.memory_space<vmem>>, %arg2: memref<128x128xf32, #tpu.memory_space<vmem>>, %arg3: memref<1x128xf32, #tpu.memory_space<vmem>>, %arg4: memref<128x128xf32, #tpu.memory_space<vmem>>, %arg5: memref<1x128xf32, #tpu.memory_space<vmem>>, %arg6: memref<128x128xf32, #tpu.memory_space<vmem>>, %arg7: memref<1x128xf32, #tpu.memory_space<vmem>>, %arg8: memref<8x128xf32, #tpu.memory_space<vmem>>) attributes {dimension_semantics = [#tpu.dimension_semantics<parallel>], iteration_bounds = array<i64: 1>, scalar_prefetch = 0 : i64, scratch_operands = 0 : i64, tpu.core_type = #tpu.core_type<tc>, window_params = [{transform_indices = @transform_0, window_bounds = array<i64: 128, 128>}, {pipeline_mode = #tpu.pipeline_mode<synchronous>, transform_indices = @transform_1, window_bounds = array<i64: 128, 128>}, {pipeline_mode = #tpu.pipeline_mode<synchronous>, transform_indices = @transform_2, window_bounds = array<i64: 1, 128>}, {pipeline_mode = #tpu.pipeline_mode<synchronous>, transform_indices = @transform_3, window_bounds = array<i64: 128, 128>}, {pipeline_mode = #tpu.pipeline_mode<synchronous>, transform_indices = @transform_4, window_bounds = array<i64: 1, 128>}, {pipeline_mode = #tpu.pipeline_mode<synchronous>, transform_indices = @transform_5, window_bounds = array<i64: 128, 128>}, {pipeline_mode = #tpu.pipeline_mode<synchronous>, transform_indices = @transform_6, window_bounds = array<i64: 1, 128>}, {transform_indices = @transform_7, window_bounds = array<i64: 8, 128>}]} {
    %c0 = arith.constant 0 : index
    %c0_0 = arith.constant 0 : index
    %0 = vector.load %arg1[%c0, %c0_0] : memref<128x128xf32, #tpu.memory_space<vmem>>, vector<128x128xf32>
    %c0_1 = arith.constant 0 : index
    %c0_2 = arith.constant 0 : index
    %1 = vector.load %arg2[%c0_1, %c0_2] : memref<128x128xf32, #tpu.memory_space<vmem>>, vector<128x128xf32>
    %cst = arith.constant dense<0.000000e+00> : vector<128x128xf32>
    %2 = tpu.matmul %0, %1, %cst {dimension_numbers = #tpu.dot_dimension_numbers<[1], [0], [0], [1], [0, 0, 1, 1], [], []>} : vector<128x128xf32>, vector<128x128xf32>, vector<128x128xf32> -> vector<128x128xf32>
    %c0_3 = arith.constant 0 : index
    %c0_4 = arith.constant 0 : index
    %3 = vector.load %arg3[%c0_3, %c0_4] : memref<1x128xf32, #tpu.memory_space<vmem>>, vector<1x128xf32>
    %4 = vector.broadcast %3 : vector<1x128xf32> to vector<128x128xf32>
    %5 = arith.addf %2, %4 : vector<128x128xf32>
    %cst_5 = arith.constant 0.000000e+00 : f32
    %6 = vector.broadcast %cst_5 : f32 to vector<128x128xf32>
    %7 = arith.maximumf %5, %6 : vector<128x128xf32>
    %8 = vector.broadcast %cst_5 : f32 to vector<128x128xf32>
    %9 = arith.subf %5, %8 : vector<128x128xf32>
    %10 = arith.cmpf one, %9, %9 : vector<128x128xf32>
    %11 = vector.broadcast %cst_5 : f32 to vector<128x128xf32>
    %12 = arith.addf %5, %11 : vector<128x128xf32>
    %13 = math.absf %9 : vector<128x128xf32>
    %cst_6 = arith.constant 0.000000e+00 : f32
    %14 = vector.broadcast %cst_6 : f32 to vector<128x128xf32>
    %15 = arith.subf %14, %13 : vector<128x128xf32>
    %16 = math.exp %15 : vector<128x128xf32>
    %17 = math.log1p %16 : vector<128x128xf32>
    %18 = arith.addf %7, %17 : vector<128x128xf32>
    %19 = arith.select %10, %12, %18 : vector<128x128xi1>, vector<128x128xf32>
    %cst_7 = arith.constant 0.693147182 : f32
    %20 = vector.broadcast %cst_7 : f32 to vector<128x128xf32>
    %21 = arith.subf %19, %20 : vector<128x128xf32>
    %c0_8 = arith.constant 0 : index
    %c0_9 = arith.constant 0 : index
    %22 = vector.load %arg4[%c0_8, %c0_9] : memref<128x128xf32, #tpu.memory_space<vmem>>, vector<128x128xf32>
    %cst_10 = arith.constant dense<0.000000e+00> : vector<128x128xf32>
    %23 = tpu.matmul %21, %22, %cst_10 {dimension_numbers = #tpu.dot_dimension_numbers<[1], [0], [0], [1], [0, 0, 1, 1], [], []>} : vector<128x128xf32>, vector<128x128xf32>, vector<128x128xf32> -> vector<128x128xf32>
    %c0_11 = arith.constant 0 : index
    %c0_12 = arith.constant 0 : index
    %24 = vector.load %arg5[%c0_11, %c0_12] : memref<1x128xf32, #tpu.memory_space<vmem>>, vector<1x128xf32>
    %25 = vector.broadcast %24 : vector<1x128xf32> to vector<128x128xf32>
    %26 = arith.addf %23, %25 : vector<128x128xf32>
    %cst_13 = arith.constant 0.000000e+00 : f32
    %27 = vector.broadcast %cst_13 : f32 to vector<128x128xf32>
    %28 = arith.maximumf %26, %27 : vector<128x128xf32>
    %29 = vector.broadcast %cst_13 : f32 to vector<128x128xf32>
    %30 = arith.subf %26, %29 : vector<128x128xf32>
    %31 = arith.cmpf one, %30, %30 : vector<128x128xf32>
    %32 = vector.broadcast %cst_13 : f32 to vector<128x128xf32>
    %33 = arith.addf %26, %32 : vector<128x128xf32>
    %34 = math.absf %30 : vector<128x128xf32>
    %cst_14 = arith.constant 0.000000e+00 : f32
    %35 = vector.broadcast %cst_14 : f32 to vector<128x128xf32>
    %36 = arith.subf %35, %34 : vector<128x128xf32>
    %37 = math.exp %36 : vector<128x128xf32>
    %38 = math.log1p %37 : vector<128x128xf32>
    %39 = arith.addf %28, %38 : vector<128x128xf32>
    %40 = arith.select %31, %33, %39 : vector<128x128xi1>, vector<128x128xf32>
    %cst_15 = arith.constant 0.693147182 : f32
    %41 = vector.broadcast %cst_15 : f32 to vector<128x128xf32>
    %42 = arith.subf %40, %41 : vector<128x128xf32>
    %c0_16 = arith.constant 0 : index
    %c0_17 = arith.constant 0 : index
    %43 = vector.load %arg6[%c0_16, %c0_17] : memref<128x128xf32, #tpu.memory_space<vmem>>, vector<128x128xf32>
    %cst_18 = arith.constant dense<0.000000e+00> : vector<128x128xf32>
    %44 = tpu.matmul %42, %43, %cst_18 {dimension_numbers = #tpu.dot_dimension_numbers<[1], [0], [0], [1], [0, 0, 1, 1], [], []>} : vector<128x128xf32>, vector<128x128xf32>, vector<128x128xf32> -> vector<128x128xf32>
    %c0_19 = arith.constant 0 : index
    %c0_20 = arith.constant 0 : index
    %45 = vector.load %arg7[%c0_19, %c0_20] : memref<1x128xf32, #tpu.memory_space<vmem>>, vector<1x128xf32>
    %46 = vector.broadcast %45 : vector<1x128xf32> to vector<128x128xf32>
    %47 = arith.addf %44, %46 : vector<128x128xf32>
    %48 = tpu.transpose %47, [1, 0] : vector<128x128xf32> -> vector<128x128xf32>
    %49 = vector.extract_strided_slice %48 {offsets = [0, 0], sizes = [8, 128], strides = [1, 1]} : vector<128x128xf32> to vector<8x128xf32>
    %c0_21 = arith.constant 0 : index
    %c0_22 = arith.constant 0 : index
    %50 = vector.load %arg8[%c0_21, %c0_22] : memref<8x128xf32, #tpu.memory_space<vmem>>, vector<8x128xf32>
    tpu.vector_store %arg8[%c0_21, %c0_22], %49 {strides = array<i32>} : memref<8x128xf32, #tpu.memory_space<vmem>>, vector<8x128xf32>,
    return
  }
  func.func @transform_0(%arg0: i32) -> (i32, i32) {
    %c0_i32 = arith.constant 0 : i32
    %c0_i32_0 = arith.constant 0 : i32
    return %arg0, %c0_i32 : i32, i32
  }
  func.func @transform_1(%arg0: i32) -> (i32, i32) {
    %c0_i32 = arith.constant 0 : i32
    %c0_i32_0 = arith.constant 0 : i32
    %c0_i32_1 = arith.constant 0 : i32
    return %c0_i32, %c0_i32_0 : i32, i32
  }
  func.func @transform_2(%arg0: i32) -> (i32, i32) {
    %c0_i32 = arith.constant 0 : i32
    %c0_i32_0 = arith.constant 0 : i32
    %c0_i32_1 = arith.constant 0 : i32
    return %c0_i32, %c0_i32_0 : i32, i32
  }
  func.func @transform_3(%arg0: i32) -> (i32, i32) {
    %c0_i32 = arith.constant 0 : i32
    %c0_i32_0 = arith.constant 0 : i32
    %c0_i32_1 = arith.constant 0 : i32
    return %c0_i32, %c0_i32_0 : i32, i32
  }
  func.func @transform_4(%arg0: i32) -> (i32, i32) {
    %c0_i32 = arith.constant 0 : i32
    %c0_i32_0 = arith.constant 0 : i32
    %c0_i32_1 = arith.constant 0 : i32
    return %c0_i32, %c0_i32_0 : i32, i32
  }
  func.func @transform_5(%arg0: i32) -> (i32, i32) {
    %c0_i32 = arith.constant 0 : i32
    %c0_i32_0 = arith.constant 0 : i32
    %c0_i32_1 = arith.constant 0 : i32
    return %c0_i32, %c0_i32_0 : i32, i32
  }
  func.func @transform_6(%arg0: i32) -> (i32, i32) {
    %c0_i32 = arith.constant 0 : i32
    %c0_i32_0 = arith.constant 0 : i32
    %c0_i32_1 = arith.constant 0 : i32
    return %c0_i32, %c0_i32_0 : i32, i32
  }
  func.func @transform_7(%arg0: i32) -> (i32, i32) {
    %c0_i32 = arith.constant 0 : i32
    %c0_i32_0 = arith.constant 0 : i32
    return %c0_i32, %arg0 : i32, i32
  }
}

</mosaic_0001>

<llo_original>
// kernel: tpu_custom_call.1
$region0: #{tpu_custom_call.1}
  #allocation0 [shape = 'u32[]', space=smem, size = 0x4, offset = 0x4, fixed_abs, tag = 'smem constant byte address 0x4 - core index']
  #allocation1 [shape = 'u32[144,128]{1,0:T(1,128)}', space=vmem, size = 0x12000, scoped, tag = 'internal scratch']
  %s0 = inlined_call_operand.hbm [shape: f32[128,128], index: 0, kind: input, shape index: {}]
  %s1 = inlined_call_operand.hbm [shape: f32[128,128], index: 1, kind: input, shape index: {}]
  %s2 = inlined_call_operand.vmem [shape: f32[1,128], index: 2, kind: input, shape index: {}]
  %s3 = inlined_call_operand.hbm [shape: f32[128,128], index: 3, kind: input, shape index: {}]
  %s4 = inlined_call_operand.vmem [shape: f32[1,128], index: 4, kind: input, shape index: {}]
  %s5 = inlined_call_operand.hbm [shape: f32[128,128], index: 5, kind: input, shape index: {}]
  %s6 = inlined_call_operand.vmem [shape: f32[1,128], index: 6, kind: input, shape index: {}]
  %s7 = inlined_call_operand.hbm [shape: f32[8,128], index: 7, kind: output, shape index: {}]
  %s8 = sld [smem:[#allocation0]]
  $region54: #{tpu_custom_call.1} parent=0
    _
  %s10 = ssub.s32 1, %s8
  %s11 = scalar_select 0, %s10, %s8
  $region1: #{tpu_custom_call.1} parent=0
    #allocation2 [shape = 'u8[65536]{0}', space=vmem, size = 0x10000, scoped, tag = 'input window, operand 0, single buffered']
    #allocation3 [shape = 's32[1]{0}', space=sflag, size = 0x4, scoped, tag = 'scoped memory for tpu_custom_call.1']
    #allocation4 [shape = 's32[1]{0}', space=sflag, size = 0x4, scoped, tag = 'scoped memory for tpu_custom_call.1']
    #allocation5 [shape = 'u8[65536]{0}', space=vmem, size = 0x10000, scoped, tag = 'input window, operand 1, single buffered']
    #allocation6 [shape = 's32[1]{0}', space=sflag, size = 0x4, scoped, tag = 'scoped memory for tpu_custom_call.1']
    #allocation7 [shape = 'u8[65536]{0}', space=vmem, size = 0x10000, scoped, tag = 'input window, operand 3, single buffered']
    #allocation8 [shape = 'u8[65536]{0}', space=vmem, size = 0x10000, scoped, tag = 'input window, operand 5, single buffered']
    #allocation9 [shape = 's32[1]{0}', space=sflag, size = 0x4, scoped, tag = 'scoped memory for tpu_custom_call.1']
    #allocation10 [shape = 'u8[4096]{0}', space=vmem, size = 0x1000, scoped, tag = 'output window, operand 0, single buffered']
    %12 = vsyncpa [#allocation3], 0
    %13 = vsyncpa [#allocation6], 0
    %14 = vsyncpa [#allocation9], 0
    %15 = vsyncpa [#allocation4], 0
    // Predicated region
    $region2: #{tpu_custom_call.1} parent=1 // pred_check
      _
    $region3: #{tpu_custom_call.1} parent=1 // pred_check_branch
      %17 = sbr.rel (0) target = $region5
    $region4: #{tpu_custom_call.1} parent=1 // pred_region
      %s19 = ssub.s32 2048, 2048
      %20 = vsyncadd [#allocation3], %s19
      %s21 = sshll.u32 [#allocation2], 4
      %s22 = int_to_ptr.vmem [resolvable:$true] %s21
      %27 = dma.hbm_to_vmem [thread:$0]  %s0, 2048, %s22, [#allocation3], 128, 128, 8
    $region5: #{tpu_custom_call.1} parent=1 // pred_fallthru
      _
    // Predicated region
    $region6: #{tpu_custom_call.1} parent=1 // pred_check
      _
    $region7: #{tpu_custom_call.1} parent=1 // pred_check_branch
      %29 = sbr.rel (0) target = $region9
    $region8: #{tpu_custom_call.1} parent=1 // pred_region
      %s31 = ssub.s32 2048, 2048
      %32 = vsyncadd [#allocation6], %s31
      %s33 = sshll.u32 [#allocation5], 4
      %s34 = int_to_ptr.vmem [resolvable:$true] %s33
      %39 = dma.hbm_to_vmem [thread:$0]  %s1, 2048, %s34, [#allocation6], 128, 128, 8
    $region9: #{tpu_custom_call.1} parent=1 // pred_fallthru
      _
    // Predicated region
    $region10: #{tpu_custom_call.1} parent=1 // pred_check
      _
    $region11: #{tpu_custom_call.1} parent=1 // pred_check_branch
      %41 = sbr.rel (0) target = $region13
    $region12: #{tpu_custom_call.1} parent=1 // pred_region
      _
    $region13: #{tpu_custom_call.1} parent=1 // pred_fallthru
      _
    // Predicated region
    $region14: #{tpu_custom_call.1} parent=1 // pred_check
      _
    $region15: #{tpu_custom_call.1} parent=1 // pred_check_branch
      %43 = sbr.rel (0) target = $region17
    $region16: #{tpu_custom_call.1} parent=1 // pred_region
      %s45 = ssub.s32 2048, 2048
      %46 = vsyncadd [#allocation6], %s45
      %s47 = sshll.u32 [#allocation7], 4
      %s48 = int_to_ptr.vmem [resolvable:$true] %s47
      %53 = dma.hbm_to_vmem [thread:$0]  %s3, 2048, %s48, [#allocation6], 128, 128, 8
    $region17: #{tpu_custom_call.1} parent=1 // pred_fallthru
      _
    // Predicated region
    $region18: #{tpu_custom_call.1} parent=1 // pred_check
      _
    $region19: #{tpu_custom_call.1} parent=1 // pred_check_branch
      %55 = sbr.rel (0) target = $region21
    $region20: #{tpu_custom_call.1} parent=1 // pred_region
      _
    $region21: #{tpu_custom_call.1} parent=1 // pred_fallthru
      _
    // Predicated region
    $region22: #{tpu_custom_call.1} parent=1 // pred_check
      _
    $region23: #{tpu_custom_call.1} parent=1 // pred_check_branch
      %57 = sbr.rel (0) target = $region25
    $region24: #{tpu_custom_call.1} parent=1 // pred_region
      %s59 = ssub.s32 2048, 2048
      %60 = vsyncadd [#allocation9], %s59
      %s61 = sshll.u32 [#allocation8], 4
      %s62 = int_to_ptr.vmem [resolvable:$true] %s61
      %67 = dma.hbm_to_vmem [thread:$0]  %s5, 2048, %s62, [#allocation9], 128, 128, 8
    $region25: #{tpu_custom_call.1} parent=1 // pred_fallthru
      _
    // Predicated region
    $region26: #{tpu_custom_call.1} parent=1 // pred_check
      _
    $region27: #{tpu_custom_call.1} parent=1 // pred_check_branch
      %69 = sbr.rel (0) target = $region29
    $region28: #{tpu_custom_call.1} parent=1 // pred_region
      _
    $region29: #{tpu_custom_call.1} parent=1 // pred_fallthru
      _
    // Predicated region
    $region30: #{tpu_custom_call.1} parent=1 // pred_check
      _
    $region31: #{tpu_custom_call.1} parent=1 // pred_check_branch
      %71 = sbr.rel (0) target = $region33
    $region32: #{tpu_custom_call.1} parent=1 // pred_region
      %72 = dma.done [#allocation3], 2048
    $region33: #{tpu_custom_call.1} parent=1 // pred_fallthru
      _
    // Predicated region
    $region34: #{tpu_custom_call.1} parent=1 // pred_check
      _
    $region35: #{tpu_custom_call.1} parent=1 // pred_check_branch
      %74 = sbr.rel (0) target = $region37
    $region36: #{tpu_custom_call.1} parent=1 // pred_region
      %75 = dma.done [#allocation6], 2048
    $region37: #{tpu_custom_call.1} parent=1 // pred_fallthru
      _
    // Predicated region
    $region38: #{tpu_custom_call.1} parent=1 // pred_check
      _
    $region39: #{tpu_custom_call.1} parent=1 // pred_check_branch
      %77 = sbr.rel (0) target = $region41
    $region40: #{tpu_custom_call.1} parent=1 // pred_region
      %78 = dma.done [#allocation6], 2048
    $region41: #{tpu_custom_call.1} parent=1 // pred_fallthru
      _
    // Predicated region
    $region42: #{tpu_custom_call.1} parent=1 // pred_check
      _
    $region43: #{tpu_custom_call.1} parent=1 // pred_check_branch
      %80 = sbr.rel (0) target = $region45
    $region44: #{tpu_custom_call.1} parent=1 // pred_region
      %81 = dma.done [#allocation9], 2048
    $region45: #{tpu_custom_call.1} parent=1 // pred_fallthru
      _
    %v82 = vld [vmem:[#allocation2] sm:$0xff]
    %v83 = vld [vmem:[#allocation2 + $0x8] sm:$0xff]
    %v84 = vld [vmem:[#allocation2 + $0x10] sm:$0xff]
    %v85 = vld [vmem:[#allocation2 + $0x18] sm:$0xff]
    %v86 = vld [vmem:[#allocation2 + $0x20] sm:$0xff]
    %v87 = vld [vmem:[#allocation2 + $0x28] sm:$0xff]
    %v88 = vld [vmem:[#allocation2 + $0x30] sm:$0xff]
    %v89 = vld [vmem:[#allocation2 + $0x38] sm:$0xff]
    %v90 = vld [vmem:[#allocation2 + $0x40] sm:$0xff]
    %v91 = vld [vmem:[#allocation2 + $0x48] sm:$0xff]
    %v92 = vld [vmem:[#allocation2 + $0x50] sm:$0xff]
    %v93 = vld [vmem:[#allocation2 + $0x58] sm:$0xff]
    %v94 = vld [vmem:[#allocation2 + $0x60] sm:$0xff]
    %v95 = vld [vmem:[#allocation2 + $0x68] sm:$0xff]
    %v96 = vld [vmem:[#allocation2 + $0x70] sm:$0xff]
    %v97 = vld [vmem:[#allocation2 + $0x78] sm:$0xff]
    %v98 = vld [vmem:[#allocation5] sm:$0xff]
    %v99 = vld [vmem:[#allocation5 + $0x8] sm:$0xff]
    %v100 = vld [vmem:[#allocation5 + $0x10] sm:$0xff]
    %v101 = vld [vmem:[#allocation5 + $0x18] sm:$0xff]
    %v102 = vld [vmem:[#allocation5 + $0x20] sm:$0xff]
    %v103 = vld [vmem:[#allocation5 + $0x28] sm:$0xff]
    %v104 = vld [vmem:[#allocation5 + $0x30] sm:$0xff]
    %v105 = vld [vmem:[#allocation5 + $0x38] sm:$0xff]
    %v106 = vld [vmem:[#allocation5 + $0x40] sm:$0xff]
    %v107 = vld [vmem:[#allocation5 + $0x48] sm:$0xff]
    %v108 = vld [vmem:[#allocation5 + $0x50] sm:$0xff]
    %v109 = vld [vmem:[#allocation5 + $0x58] sm:$0xff]
    %v110 = vld [vmem:[#allocation5 + $0x60] sm:$0xff]
    %v111 = vld [vmem:[#allocation5 + $0x68] sm:$0xff]
    %v112 = vld [vmem:[#allocation5 + $0x70] sm:$0xff]
    %v113 = vld [vmem:[#allocation5 + $0x78] sm:$0xff]
    %v114 = vld [vmem:[%s2] sm:$0x1]
    %v116 = vlaneseq
    %v117 = vshrl.u32 %v116, 7
    %v118 = vsub.s32 0, %v117
    %v119 = vrot.slane %v114, %v118
    %121 = vmatprep.subr.mxu0 0.0
    %122 = vmatpush1.msra.mxu0 %v98
    %123 = vmatprep.subr.mxu0 0.0
    %124 = vmatpush1.msra.mxu0 %v99
    %125 = vmatprep.subr.mxu0 0.0
    %126 = vmatpush1.msra.mxu0 %v100
    %127 = vmatprep.subr.mxu0 0.0
    %128 = vmatpush1.msra.mxu0 %v101
    %129 = vmatprep.subr.mxu0 0.0
    %130 = vmatpush1.msra.mxu0 %v102
    %131 = vmatprep.subr.mxu0 0.0
    %132 = vmatpush1.msra.mxu0 %v103
    %133 = vmatprep.subr.mxu0 0.0
    %134 = vmatpush1.msra.mxu0 %v104
    %135 = vmatprep.subr.mxu0 0.0
    %136 = vmatpush1.msra.mxu0 %v105
    %137 = vmatprep.subr.mxu0 0.0
    %138 = vmatpush1.msra.mxu0 %v106
    %139 = vmatprep.subr.mxu0 0.0
    %140 = vmatpush1.msra.mxu0 %v107
    %141 = vmatprep.subr.mxu0 0.0
    %142 = vmatpush1.msra.mxu0 %v108
    %143 = vmatprep.subr.mxu0 0.0
    %144 = vmatpush1.msra.mxu0 %v109
    %145 = vmatprep.subr.mxu0 0.0
    %146 = vmatpush1.msra.mxu0 %v110
    %147 = vmatprep.subr.mxu0 0.0
    %148 = vmatpush1.msra.mxu0 %v111
    %149 = vmatprep.subr.mxu0 0.0
    %150 = vmatpush1.msra.mxu0 %v112
    %151 = vmatprep.subr.mxu0 0.0
    %152 = vmatpush1.msra.mxu0 %v113
    %153 = vmatprep.subr.mxu0 0.0
    %154 = vmatpush1.msra.mxu0 0.0
    %155 = vmatprep.subr.mxu0 0.0
    %156 = vmatpush1.msra.mxu0 0.0
    %157 = vmatprep.subr.mxu0 0.0
    %158 = vmatpush1.msra.mxu0 0.0
    %159 = vmatprep.subr.mxu0 0.0
    %160 = vmatpush1.msra.mxu0 0.0
    %161 = vmatprep.subr.mxu0 0.0
    %162 = vmatpush1.msra.mxu0 0.0
    %163 = vmatprep.subr.mxu0 0.0
    %164 = vmatpush1.msra.mxu0 0.0
    %165 = vmatprep.subr.mxu0 0.0
    %166 = vmatpush1.msra.mxu0 0.0
    %167 = vmatprep.subr.mxu0 0.0
    %168 = vmatpush1.msra.mxu0 0.0
    %169 = vmatprep.subr.mxu0 0.0
    %170 = vmatpush1.msra.mxu0 0.0
    %171 = vmatprep.subr.mxu0 0.0
    %172 = vmatpush1.msra.mxu0 0.0
    %173 = vmatprep.subr.mxu0 0.0
    %174 = vmatpush1.msra.mxu0 0.0
    %175 = vmatprep.subr.mxu0 0.0
    %176 = vmatpush1.msra.mxu0 0.0
    %177 = vmatprep.subr.mxu0 0.0
    %178 = vmatpush1.msra.mxu0 0.0
    %179 = vmatprep.subr.mxu0 0.0
    %180 = vmatpush1.msra.mxu0 0.0
    %181 = vmatprep.subr.mxu0 0.0
    %182 = vmatpush1.msra.mxu0 0.0
    %183 = vmatprep.subr.mxu0 0.0
    %184 = vmatpush1.msra.mxu0 0.0
    %185 = vmatprep.mubr.f32.mxu0 0.0
    %186 = vmatmul.mubr.f32.gmra.mrb[0].mxu0 %v82
    %v187 = vpop.f32.mrb[0].mxu0
    %v188 = vadd.f32 %v119, %v187
    %v189 = vpop.f32.mrb[0].mxu0
    %190 = vmatprep.mubr.f32.mxu0 0.0
    %191 = vmatmul.mubr.f32.gmra.mrb[0].mxu0 %v83
    %v192 = vpop.f32.mrb[0].mxu0
    %v193 = vadd.f32 %v119, %v192
    %v194 = vpop.f32.mrb[0].mxu0
    %195 = vmatprep.mubr.f32.mxu0 0.0
    %196 = vmatmul.mubr.f32.gmra.mrb[0].mxu0 %v84
    %v197 = vpop.f32.mrb[0].mxu0
    %v198 = vadd.f32 %v119, %v197
    %v199 = vpop.f32.mrb[0].mxu0
    %200 = vmatprep.mubr.f32.mxu0 0.0
    %201 = vmatmul.mubr.f32.gmra.mrb[0].mxu0 %v85
    %v202 = vpop.f32.mrb[0].mxu0
    %v203 = vadd.f32 %v119, %v202
    %v204 = vpop.f32.mrb[0].mxu0
    %205 = vmatprep.mubr.f32.mxu0 0.0
    %206 = vmatmul.mubr.f32.gmra.mrb[0].mxu0 %v86
    %v207 = vpop.f32.mrb[0].mxu0
    %v208 = vadd.f32 %v119, %v207
    %v209 = vpop.f32.mrb[0].mxu0
    %210 = vmatprep.mubr.f32.mxu0 0.0
    %211 = vmatmul.mubr.f32.gmra.mrb[0].mxu0 %v87
    %v212 = vpop.f32.mrb[0].mxu0
    %v213 = vadd.f32 %v119, %v212
    %v214 = vpop.f32.mrb[0].mxu0
    %215 = vmatprep.mubr.f32.mxu0 0.0
    %216 = vmatmul.mubr.f32.gmra.mrb[0].mxu0 %v88
    %v217 = vpop.f32.mrb[0].mxu0
    %v218 = vadd.f32 %v119, %v217
    %v219 = vpop.f32.mrb[0].mxu0
    %220 = vmatprep.mubr.f32.mxu0 0.0
    %221 = vmatmul.mubr.f32.gmra.mrb[0].mxu0 %v89
    %v222 = vpop.f32.mrb[0].mxu0
    %v223 = vadd.f32 %v119, %v222
    %v224 = vpop.f32.mrb[0].mxu0
    %225 = vmatprep.mubr.f32.mxu0 0.0
    %226 = vmatmul.mubr.f32.gmra.mrb[0].mxu0 %v90
    %v227 = vpop.f32.mrb[0].mxu0
    %v228 = vadd.f32 %v119, %v227
    %v229 = vpop.f32.mrb[0].mxu0
    %230 = vmatprep.mubr.f32.mxu0 0.0
    %231 = vmatmul.mubr.f32.gmra.mrb[0].mxu0 %v91
    %v232 = vpop.f32.mrb[0].mxu0
    %v233 = vadd.f32 %v119, %v232
    %v234 = vpop.f32.mrb[0].mxu0
    %235 = vmatprep.mubr.f32.mxu0 0.0
    %236 = vmatmul.mubr.f32.gmra.mrb[0].mxu0 %v92
    %v237 = vpop.f32.mrb[0].mxu0
    %v238 = vadd.f32 %v119, %v237
    %v239 = vpop.f32.mrb[0].mxu0
    %240 = vmatprep.mubr.f32.mxu0 0.0
    %241 = vmatmul.mubr.f32.gmra.mrb[0].mxu0 %v93
    %v242 = vpop.f32.mrb[0].mxu0
    %v243 = vadd.f32 %v119, %v242
    %v244 = vpop.f32.mrb[0].mxu0
    %245 = vmatprep.mubr.f32.mxu0 0.0
    %246 = vmatmul.mubr.f32.gmra.mrb[0].mxu0 %v94
    %v247 = vpop.f32.mrb[0].mxu0
    %v248 = vadd.f32 %v119, %v247
    %v249 = vpop.f32.mrb[0].mxu0
    %250 = vmatprep.mubr.f32.mxu0 0.0
    %251 = vmatmul.mubr.f32.gmra.mrb[0].mxu0 %v95
    %v252 = vpop.f32.mrb[0].mxu0
    %v253 = vadd.f32 %v119, %v252
    %v254 = vpop.f32.mrb[0].mxu0
    %255 = vmatprep.mubr.f32.mxu0 0.0
    %256 = vmatmul.mubr.f32.gmra.mrb[0].mxu0 %v96
    %v257 = vpop.f32.mrb[0].mxu0
    %v258 = vadd.f32 %v119, %v257
    %v259 = vpop.f32.mrb[0].mxu0
    %260 = vmatprep.mubr.f32.mxu0 0.0
    %261 = vmatmul.mubr.f32.gmra.mrb[0].mxu0 %v97
    %v262 = vpop.f32.mrb[0].mxu0
    %v263 = vadd.f32 %v119, %v262
    %v264 = vpop.f32.mrb[0].mxu0
    %265 = vdwg.mxu0
    %v266 = vmax.f32 %v188, 0.0
    %v267 = vmax.f32 %v193, 0.0
    %v268 = vmax.f32 %v198, 0.0
    %v269 = vmax.f32 %v203, 0.0
    %v270 = vmax.f32 %v208, 0.0
    %v271 = vmax.f32 %v213, 0.0
    %v272 = vmax.f32 %v218, 0.0
    %v273 = vmax.f32 %v223, 0.0
    %v274 = vmax.f32 %v228, 0.0
    %v275 = vmax.f32 %v233, 0.0
    %v276 = vmax.f32 %v238, 0.0
    %v277 = vmax.f32 %v243, 0.0
    %v278 = vmax.f32 %v248, 0.0
    %v279 = vmax.f32 %v253, 0.0
    %v280 = vmax.f32 %v258, 0.0
    %v281 = vmax.f32 %v263, 0.0
    %vm282 = vcmp.ne.f32.partialorder %v188, %v188
    %vm283 = vcmp.ne.f32.partialorder %v193, %v193
    %vm284 = vcmp.ne.f32.partialorder %v198, %v198
    %vm285 = vcmp.ne.f32.partialorder %v203, %v203
    %vm286 = vcmp.ne.f32.partialorder %v208, %v208
    %vm287 = vcmp.ne.f32.partialorder %v213, %v213
    %vm288 = vcmp.ne.f32.partialorder %v218, %v218
    %vm289 = vcmp.ne.f32.partialorder %v223, %v223
    %vm290 = vcmp.ne.f32.partialorder %v228, %v228
    %vm291 = vcmp.ne.f32.partialorder %v233, %v233
    %vm292 = vcmp.ne.f32.partialorder %v238, %v238
    %vm293 = vcmp.ne.f32.partialorder %v243, %v243
    %vm294 = vcmp.ne.f32.partialorder %v248, %v248
    %vm295 = vcmp.ne.f32.partialorder %v253, %v253
    %vm296 = vcmp.ne.f32.partialorder %v258, %v258
    %vm297 = vcmp.ne.f32.partialorder %v263, %v263
    %v298 = vadd.f32 %v188, 0.0
    %v299 = vadd.f32 %v193, 0.0
    %v300 = vadd.f32 %v198, 0.0
    %v301 = vadd.f32 %v203, 0.0
    %v302 = vadd.f32 %v208, 0.0
    %v303 = vadd.f32 %v213, 0.0
    %v304 = vadd.f32 %v218, 0.0
    %v305 = vadd.f32 %v223, 0.0
    %v306 = vadd.f32 %v228, 0.0
    %v307 = vadd.f32 %v233, 0.0
    %v308 = vadd.f32 %v238, 0.0
    %v309 = vadd.f32 %v243, 0.0
    %v310 = vadd.f32 %v248, 0.0
    %v311 = vadd.f32 %v253, 0.0
    %v312 = vadd.f32 %v258, 0.0
    %v313 = vadd.f32 %v263, 0.0
    %v314 = vand.u32 2147483647, %v188
    %v315 = vand.u32 2147483647, %v193
    %v316 = vand.u32 2147483647, %v198
    %v317 = vand.u32 2147483647, %v203
    %v318 = vand.u32 2147483647, %v208
    %v319 = vand.u32 2147483647, %v213
    %v320 = vand.u32 2147483647, %v218
    %v321 = vand.u32 2147483647, %v223
    %v322 = vand.u32 2147483647, %v228
    %v323 = vand.u32 2147483647, %v233
    %v324 = vand.u32 2147483647, %v238
    %v325 = vand.u32 2147483647, %v243
    %v326 = vand.u32 2147483647, %v248
    %v327 = vand.u32 2147483647, %v253
    %v328 = vand.u32 2147483647, %v258
    %v329 = vand.u32 2147483647, %v263
    %v330 = vsub.f32 0.0, %v314
    %v331 = vsub.f32 0.0, %v315
    %v332 = vsub.f32 0.0, %v316
    %v333 = vsub.f32 0.0, %v317
    %v334 = vsub.f32 0.0, %v318
    %v335 = vsub.f32 0.0, %v319
    %v336 = vsub.f32 0.0, %v320
    %v337 = vsub.f32 0.0, %v321
    %v338 = vsub.f32 0.0, %v322
    %v339 = vsub.f32 0.0, %v323
    %v340 = vsub.f32 0.0, %v324
    %v341 = vsub.f32 0.0, %v325
    %v342 = vsub.f32 0.0, %v326
    %v343 = vsub.f32 0.0, %v327
    %v344 = vsub.f32 0.0, %v328
    %v345 = vsub.f32 0.0, %v329
    %v346 = vmul.f32 %v330, 1.442695
    %v347 = vpow.pop %v346
    %v348 = vmul.f32 %v331, 1.442695
    %v349 = vpow.pop %v348
    %v350 = vmul.f32 %v332, 1.442695
    %v351 = vpow.pop %v350
    %v352 = vmul.f32 %v333, 1.442695
    %v353 = vpow.pop %v352
    %v354 = vmul.f32 %v334, 1.442695
    %v355 = vpow.pop %v354
    %v356 = vmul.f32 %v335, 1.442695
    %v357 = vpow.pop %v356
    %v358 = vmul.f32 %v336, 1.442695
    %v359 = vpow.pop %v358
    %v360 = vmul.f32 %v337, 1.442695
    %v361 = vpow.pop %v360
    %v362 = vmul.f32 %v338, 1.442695
    %v363 = vpow.pop %v362
    %v364 = vmul.f32 %v339, 1.442695
    %v365 = vpow.pop %v364
    %v366 = vmul.f32 %v340, 1.442695
    %v367 = vpow.pop %v366
    %v368 = vmul.f32 %v341, 1.442695
    %v369 = vpow.pop %v368
    %v370 = vmul.f32 %v342, 1.442695
    %v371 = vpow.pop %v370
    %v372 = vmul.f32 %v343, 1.442695
    %v373 = vpow.pop %v372
    %v374 = vmul.f32 %v344, 1.442695
    %v375 = vpow.pop %v374
    %v376 = vmul.f32 %v345, 1.442695
    %v377 = vpow.pop %v376
    %v378 = vadd.f32 %v347, 1.0
    %v379 = vlog2.pop %v378
    %v380 = vmul.f32 %v379, 0.6931472
    %v381 = vmul.f32 -0.5, %v347
    %v382 = vadd.f32 %v381, 1.0
    %v383 = vmul.f32 %v382, %v347
    %v384 = vand.u32 2147483647, %v347
    %vm385 = vcmp.lt.f32.partialorder %v384, 0.0004427343
    %v386 = vsel %vm385, %v383, %v380
    %v387 = vadd.f32 %v349, 1.0
    %v388 = vlog2.pop %v387
    %v389 = vmul.f32 %v388, 0.6931472
    %v390 = vmul.f32 -0.5, %v349
    %v391 = vadd.f32 %v390, 1.0
    %v392 = vmul.f32 %v391, %v349
    %v393 = vand.u32 2147483647, %v349
    %vm394 = vcmp.lt.f32.partialorder %v393, 0.0004427343
    %v395 = vsel %vm394, %v392, %v389
    %v396 = vadd.f32 %v351, 1.0
    %v397 = vlog2.pop %v396
    %v398 = vmul.f32 %v397, 0.6931472
    %v399 = vmul.f32 -0.5, %v351
    %v400 = vadd.f32 %v399, 1.0
    %v401 = vmul.f32 %v400, %v351
    %v402 = vand.u32 2147483647, %v351
    %vm403 = vcmp.lt.f32.partialorder %v402, 0.0004427343
    %v404 = vsel %vm403, %v401, %v398
    %v405 = vadd.f32 %v353, 1.0
    %v406 = vlog2.pop %v405
    %v407 = vmul.f32 %v406, 0.6931472
    %v408 = vmul.f32 -0.5, %v353
    %v409 = vadd.f32 %v408, 1.0
    %v410 = vmul.f32 %v409, %v353
    %v411 = vand.u32 2147483647, %v353
    %vm412 = vcmp.lt.f32.partialorder %v411, 0.0004427343
    %v413 = vsel %vm412, %v410, %v407
    %v414 = vadd.f32 %v355, 1.0
    %v415 = vlog2.pop %v414
    %v416 = vmul.f32 %v415, 0.6931472
    %v417 = vmul.f32 -0.5, %v355
    %v418 = vadd.f32 %v417, 1.0
    %v419 = vmul.f32 %v418, %v355
    %v420 = vand.u32 2147483647, %v355
    %vm421 = vcmp.lt.f32.partialorder %v420, 0.0004427343
    %v422 = vsel %vm421, %v419, %v416
    %v423 = vadd.f32 %v357, 1.0
    %v424 = vlog2.pop %v423
    %v425 = vmul.f32 %v424, 0.6931472
    %v426 = vmul.f32 -0.5, %v357
    %v427 = vadd.f32 %v426, 1.0
    %v428 = vmul.f32 %v427, %v357
    %v429 = vand.u32 2147483647, %v357
    %vm430 = vcmp.lt.f32.partialorder %v429, 0.0004427343
    %v431 = vsel %vm430, %v428, %v425
    %v432 = vadd.f32 %v359, 1.0
    %v433 = vlog2.pop %v432
    %v434 = vmul.f32 %v433, 0.6931472
    %v435 = vmul.f32 -0.5, %v359
    %v436 = vadd.f32 %v435, 1.0
    %v437 = vmul.f32 %v436, %v359
    %v438 = vand.u32 2147483647, %v359
    %vm439 = vcmp.lt.f32.partialorder %v438, 0.0004427343
    %v440 = vsel %vm439, %v437, %v434
    %v441 = vadd.f32 %v361, 1.0
    %v442 = vlog2.pop %v441
    %v443 = vmul.f32 %v442, 0.6931472
    %v444 = vmul.f32 -0.5, %v361
    %v445 = vadd.f32 %v444, 1.0
    %v446 = vmul.f32 %v445, %v361
    %v447 = vand.u32 2147483647, %v361
    %vm448 = vcmp.lt.f32.partialorder %v447, 0.0004427343
    %v449 = vsel %vm448, %v446, %v443
    %v450 = vadd.f32 %v363, 1.0
    %v451 = vlog2.pop %v450
    %v452 = vmul.f32 %v451, 0.6931472
    %v453 = vmul.f32 -0.5, %v363
    %v454 = vadd.f32 %v453, 1.0
    %v455 = vmul.f32 %v454, %v363
    %v456 = vand.u32 2147483647, %v363
    %vm457 = vcmp.lt.f32.partialorder %v456, 0.0004427343
    %v458 = vsel %vm457, %v455, %v452
    %v459 = vadd.f32 %v365, 1.0
    %v460 = vlog2.pop %v459
    %v461 = vmul.f32 %v460, 0.6931472
    %v462 = vmul.f32 -0.5, %v365
    %v463 = vadd.f32 %v462, 1.0
    %v464 = vmul.f32 %v463, %v365
    %v465 = vand.u32 2147483647, %v365
    %vm466 = vcmp.lt.f32.partialorder %v465, 0.0004427343
    %v467 = vsel %vm466, %v464, %v461
    %v468 = vadd.f32 %v367, 1.0
    %v469 = vlog2.pop %v468
    %v470 = vmul.f32 %v469, 0.6931472
    %v471 = vmul.f32 -0.5, %v367
    %v472 = vadd.f32 %v471, 1.0
    %v473 = vmul.f32 %v472, %v367
    %v474 = vand.u32 2147483647, %v367
    %vm475 = vcmp.lt.f32.partialorder %v474, 0.0004427343
    %v476 = vsel %vm475, %v473, %v470
    %v477 = vadd.f32 %v369, 1.0
    %v478 = vlog2.pop %v477
    %v479 = vmul.f32 %v478, 0.6931472
    %v480 = vmul.f32 -0.5, %v369
    %v481 = vadd.f32 %v480, 1.0
    %v482 = vmul.f32 %v481, %v369
    %v483 = vand.u32 2147483647, %v369
    %vm484 = vcmp.lt.f32.partialorder %v483, 0.0004427343
    %v485 = vsel %vm484, %v482, %v479
    %v486 = vadd.f32 %v371, 1.0
    %v487 = vlog2.pop %v486
    %v488 = vmul.f32 %v487, 0.6931472
    %v489 = vmul.f32 -0.5, %v371
    %v490 = vadd.f32 %v489, 1.0
    %v491 = vmul.f32 %v490, %v371
    %v492 = vand.u32 2147483647, %v371
    %vm493 = vcmp.lt.f32.partialorder %v492, 0.0004427343
    %v494 = vsel %vm493, %v491, %v488
    %v495 = vadd.f32 %v373, 1.0
    %v496 = vlog2.pop %v495
    %v497 = vmul.f32 %v496, 0.6931472
    %v498 = vmul.f32 -0.5, %v373
    %v499 = vadd.f32 %v498, 1.0
    %v500 = vmul.f32 %v499, %v373
    %v501 = vand.u32 2147483647, %v373
    %vm502 = vcmp.lt.f32.partialorder %v501, 0.0004427343
    %v503 = vsel %vm502, %v500, %v497
    %v504 = vadd.f32 %v375, 1.0
    %v505 = vlog2.pop %v504
    %v506 = vmul.f32 %v505, 0.6931472
    %v507 = vmul.f32 -0.5, %v375
    %v508 = vadd.f32 %v507, 1.0
    %v509 = vmul.f32 %v508, %v375
    %v510 = vand.u32 2147483647, %v375
    %vm511 = vcmp.lt.f32.partialorder %v510, 0.0004427343
    %v512 = vsel %vm511, %v509, %v506
    %v513 = vadd.f32 %v377, 1.0
    %v514 = vlog2.pop %v513
    %v515 = vmul.f32 %v514, 0.6931472
    %v516 = vmul.f32 -0.5, %v377
    %v517 = vadd.f32 %v516, 1.0
    %v518 = vmul.f32 %v517, %v377
    %v519 = vand.u32 2147483647, %v377
    %vm520 = vcmp.lt.f32.partialorder %v519, 0.0004427343
    %v521 = vsel %vm520, %v518, %v515
    %v522 = vadd.f32 %v266, %v386
    %v523 = vadd.f32 %v267, %v395
    %v524 = vadd.f32 %v268, %v404
    %v525 = vadd.f32 %v269, %v413
    %v526 = vadd.f32 %v270, %v422
    %v527 = vadd.f32 %v271, %v431
    %v528 = vadd.f32 %v272, %v440
    %v529 = vadd.f32 %v273, %v449
    %v530 = vadd.f32 %v274, %v458
    %v531 = vadd.f32 %v275, %v467
    %v532 = vadd.f32 %v276, %v476
    %v533 = vadd.f32 %v277, %v485
    %v534 = vadd.f32 %v278, %v494
    %v535 = vadd.f32 %v279, %v503
    %v536 = vadd.f32 %v280, %v512
    %v537 = vadd.f32 %v281, %v521
    %v538 = vsel %vm282, %v298, %v522
    %v539 = vsel %vm283, %v299, %v523
    %v540 = vsel %vm284, %v300, %v524
    %v541 = vsel %vm285, %v301, %v525
    %v542 = vsel %vm286, %v302, %v526
    %v543 = vsel %vm287, %v303, %v527
    %v544 = vsel %vm288, %v304, %v528
    %v545 = vsel %vm289, %v305, %v529
    %v546 = vsel %vm290, %v306, %v530
    %v547 = vsel %vm291, %v307, %v531
    %v548 = vsel %vm292, %v308, %v532
    %v549 = vsel %vm293, %v309, %v533
    %v550 = vsel %vm294, %v310, %v534
    %v551 = vsel %vm295, %v311, %v535
    %v552 = vsel %vm296, %v312, %v536
    %v553 = vsel %vm297, %v313, %v537
    %v554 = vsub.f32 %v538, 0.6931472
    %v555 = vsub.f32 %v539, 0.6931472
    %v556 = vsub.f32 %v540, 0.6931472
    %v557 = vsub.f32 %v541, 0.6931472
    %v558 = vsub.f32 %v542, 0.6931472
    %v559 = vsub.f32 %v543, 0.6931472
    %v560 = vsub.f32 %v544, 0.6931472
    %v561 = vsub.f32 %v545, 0.6931472
    %v562 = vsub.f32 %v546, 0.6931472
    %v563 = vsub.f32 %v547, 0.6931472
    %v564 = vsub.f32 %v548, 0.6931472
    %v565 = vsub.f32 %v549, 0.6931472
    %v566 = vsub.f32 %v550, 0.6931472
    %v567 = vsub.f32 %v551, 0.6931472
    %v568 = vsub.f32 %v552, 0.6931472
    %v569 = vsub.f32 %v553, 0.6931472
    %v570 = vld [vmem:[#allocation7] sm:$0xff]
    %v571 = vld [vmem:[#allocation7 + $0x8] sm:$0xff]
    %v572 = vld [vmem:[#allocation7 + $0x10] sm:$0xff]
    %v573 = vld [vmem:[#allocation7 + $0x18] sm:$0xff]
    %v574 = vld [vmem:[#allocation7 + $0x20] sm:$0xff]
    %v575 = vld [vmem:[#allocation7 + $0x28] sm:$0xff]
    %v576 = vld [vmem:[#allocation7 + $0x30] sm:$0xff]
    %v577 = vld [vmem:[#allocation7 + $0x38] sm:$0xff]
    %v578 = vld [vmem:[#allocation7 + $0x40] sm:$0xff]
    %v579 = vld [vmem:[#allocation7 + $0x48] sm:$0xff]
    %v580 = vld [vmem:[#allocation7 + $0x50] sm:$0xff]
    %v581 = vld [vmem:[#allocation7 + $0x58] sm:$0xff]
    %v582 = vld [vmem:[#allocation7 + $0x60] sm:$0xff]
    %v583 = vld [vmem:[#allocation7 + $0x68] sm:$0xff]
    %v584 = vld [vmem:[#allocation7 + $0x70] sm:$0xff]
    %v585 = vld [vmem:[#allocation7 + $0x78] sm:$0xff]
    %v586 = vld [vmem:[%s4] sm:$0x1]
    %v588 = vlaneseq
    %v589 = vshrl.u32 %v588, 7
    %v590 = vsub.s32 0, %v589
    %v591 = vrot.slane %v586, %v590
    %593 = vmatprep.subr.mxu0 0.0
    %594 = vmatpush1.msra.mxu0 %v570
    %595 = vmatprep.subr.mxu0 0.0
    %596 = vmatpush1.msra.mxu0 %v571
    %597 = vmatprep.subr.mxu0 0.0
    %598 = vmatpush1.msra.mxu0 %v572
    %599 = vmatprep.subr.mxu0 0.0
    %600 = vmatpush1.msra.mxu0 %v573
    %601 = vmatprep.subr.mxu0 0.0
    %602 = vmatpush1.msra.mxu0 %v574
    %603 = vmatprep.subr.mxu0 0.0
    %604 = vmatpush1.msra.mxu0 %v575
    %605 = vmatprep.subr.mxu0 0.0
    %606 = vmatpush1.msra.mxu0 %v576
    %607 = vmatprep.subr.mxu0 0.0
    %608 = vmatpush1.msra.mxu0 %v577
    %609 = vmatprep.subr.mxu0 0.0
    %610 = vmatpush1.msra.mxu0 %v578
    %611 = vmatprep.subr.mxu0 0.0
    %612 = vmatpush1.msra.mxu0 %v579
    %613 = vmatprep.subr.mxu0 0.0
    %614 = vmatpush1.msra.mxu0 %v580
    %615 = vmatprep.subr.mxu0 0.0
    %616 = vmatpush1.msra.mxu0 %v581
    %617 = vmatprep.subr.mxu0 0.0
    %618 = vmatpush1.msra.mxu0 %v582
    %619 = vmatprep.subr.mxu0 0.0
    %620 = vmatpush1.msra.mxu0 %v583
    %621 = vmatprep.subr.mxu0 0.0
    %622 = vmatpush1.msra.mxu0 %v584
    %623 = vmatprep.subr.mxu0 0.0
    %624 = vmatpush1.msra.mxu0 %v585
    %625 = vmatprep.subr.mxu0 0.0
    %626 = vmatpush1.msra.mxu0 0.0
    %627 = vmatprep.subr.mxu0 0.0
    %628 = vmatpush1.msra.mxu0 0.0
    %629 = vmatprep.subr.mxu0 0.0
    %630 = vmatpush1.msra.mxu0 0.0
    %631 = vmatprep.subr.mxu0 0.0
    %632 = vmatpush1.msra.mxu0 0.0
    %633 = vmatprep.subr.mxu0 0.0
    %634 = vmatpush1.msra.mxu0 0.0
    %635 = vmatprep.subr.mxu0 0.0
    %636 = vmatpush1.msra.mxu0 0.0
    %637 = vmatprep.subr.mxu0 0.0
    %638 = vmatpush1.msra.mxu0 0.0
    %639 = vmatprep.subr.mxu0 0.0
    %640 = vmatpush1.msra.mxu0 0.0
    %641 = vmatprep.subr.mxu0 0.0
    %642 = vmatpush1.msra.mxu0 0.0
    %643 = vmatprep.subr.mxu0 0.0
    %644 = vmatpush1.msra.mxu0 0.0
    %645 = vmatprep.subr.mxu0 0.0
    %646 = vmatpush1.msra.mxu0 0.0
    %647 = vmatprep.subr.mxu0 0.0
    %648 = vmatpush1.msra.mxu0 0.0
    %649 = vmatprep.subr.mxu0 0.0
    %650 = vmatpush1.msra.mxu0 0.0
    %651 = vmatprep.subr.mxu0 0.0
    %652 = vmatpush1.msra.mxu0 0.0
    %653 = vmatprep.subr.mxu0 0.0
    %654 = vmatpush1.msra.mxu0 0.0
    %655 = vmatprep.subr.mxu0 0.0
    %656 = vmatpush1.msra.mxu0 0.0
    %657 = vmatprep.mubr.f32.mxu0 0.0
    %658 = vmatmul.mubr.f32.gmra.mrb[0].mxu0 %v554
    %v659 = vpop.f32.mrb[0].mxu0
    %v660 = vadd.f32 %v591, %v659
    %v661 = vpop.f32.mrb[0].mxu0
    %662 = vmatprep.mubr.f32.mxu0 0.0
    %663 = vmatmul.mubr.f32.gmra.mrb[0].mxu0 %v555
    %v664 = vpop.f32.mrb[0].mxu0
    %v665 = vadd.f32 %v591, %v664
    %v666 = vpop.f32.mrb[0].mxu0
    %667 = vmatprep.mubr.f32.mxu0 0.0
    %668 = vmatmul.mubr.f32.gmra.mrb[0].mxu0 %v556
    %v669 = vpop.f32.mrb[0].mxu0
    %v670 = vadd.f32 %v591, %v669
    %v671 = vpop.f32.mrb[0].mxu0
    %672 = vmatprep.mubr.f32.mxu0 0.0
    %673 = vmatmul.mubr.f32.gmra.mrb[0].mxu0 %v557
    %v674 = vpop.f32.mrb[0].mxu0
    %v675 = vadd.f32 %v591, %v674
    %v676 = vpop.f32.mrb[0].mxu0
    %677 = vmatprep.mubr.f32.mxu0 0.0
    %678 = vmatmul.mubr.f32.gmra.mrb[0].mxu0 %v558
    %v679 = vpop.f32.mrb[0].mxu0
    %v680 = vadd.f32 %v591, %v679
    %v681 = vpop.f32.mrb[0].mxu0
    %682 = vmatprep.mubr.f32.mxu0 0.0
    %683 = vmatmul.mubr.f32.gmra.mrb[0].mxu0 %v559
    %v684 = vpop.f32.mrb[0].mxu0
    %v685 = vadd.f32 %v591, %v684
    %v686 = vpop.f32.mrb[0].mxu0
    %687 = vmatprep.mubr.f32.mxu0 0.0
    %688 = vmatmul.mubr.f32.gmra.mrb[0].mxu0 %v560
    %v689 = vpop.f32.mrb[0].mxu0
    %v690 = vadd.f32 %v591, %v689
    %v691 = vpop.f32.mrb[0].mxu0
    %692 = vmatprep.mubr.f32.mxu0 0.0
    %693 = vmatmul.mubr.f32.gmra.mrb[0].mxu0 %v561
    %v694 = vpop.f32.mrb[0].mxu0
    %v695 = vadd.f32 %v591, %v694
    %v696 = vpop.f32.mrb[0].mxu0
    %697 = vmatprep.mubr.f32.mxu0 0.0
    %698 = vmatmul.mubr.f32.gmra.mrb[0].mxu0 %v562
    %v699 = vpop.f32.mrb[0].mxu0
    %v700 = vadd.f32 %v591, %v699
    %v701 = vpop.f32.mrb[0].mxu0
    %702 = vmatprep.mubr.f32.mxu0 0.0
    %703 = vmatmul.mubr.f32.gmra.mrb[0].mxu0 %v563
    %v704 = vpop.f32.mrb[0].mxu0
    %v705 = vadd.f32 %v591, %v704
    %v706 = vpop.f32.mrb[0].mxu0
    %707 = vmatprep.mubr.f32.mxu0 0.0
    %708 = vmatmul.mubr.f32.gmra.mrb[0].mxu0 %v564
    %v709 = vpop.f32.mrb[0].mxu0
    %v710 = vadd.f32 %v591, %v709
    %v711 = vpop.f32.mrb[0].mxu0
    %712 = vmatprep.mubr.f32.mxu0 0.0
    %713 = vmatmul.mubr.f32.gmra.mrb[0].mxu0 %v565
    %v714 = vpop.f32.mrb[0].mxu0
    %v715 = vadd.f32 %v591, %v714
    %v716 = vpop.f32.mrb[0].mxu0
    %717 = vmatprep.mubr.f32.mxu0 0.0
    %718 = vmatmul.mubr.f32.gmra.mrb[0].mxu0 %v566
    %v719 = vpop.f32.mrb[0].mxu0
    %v720 = vadd.f32 %v591, %v719
    %v721 = vpop.f32.mrb[0].mxu0
    %722 = vmatprep.mubr.f32.mxu0 0.0
    %723 = vmatmul.mubr.f32.gmra.mrb[0].mxu0 %v567
    %v724 = vpop.f32.mrb[0].mxu0
    %v725 = vadd.f32 %v591, %v724
    %v726 = vpop.f32.mrb[0].mxu0
    %727 = vmatprep.mubr.f32.mxu0 0.0
    %728 = vmatmul.mubr.f32.gmra.mrb[0].mxu0 %v568
    %v729 = vpop.f32.mrb[0].mxu0
    %v730 = vadd.f32 %v591, %v729
    %v731 = vpop.f32.mrb[0].mxu0
    %732 = vmatprep.mubr.f32.mxu0 0.0
    %733 = vmatmul.mubr.f32.gmra.mrb[0].mxu0 %v569
    %v734 = vpop.f32.mrb[0].mxu0
    %v735 = vadd.f32 %v591, %v734
    %v736 = vpop.f32.mrb[0].mxu0
    %737 = vdwg.mxu0
    %v738 = vmax.f32 %v660, 0.0
    %v739 = vmax.f32 %v665, 0.0
    %v740 = vmax.f32 %v670, 0.0
    %v741 = vmax.f32 %v675, 0.0
    %v742 = vmax.f32 %v680, 0.0
    %v743 = vmax.f32 %v685, 0.0
    %v744 = vmax.f32 %v690, 0.0
    %v745 = vmax.f32 %v695, 0.0
    %v746 = vmax.f32 %v700, 0.0
    %v747 = vmax.f32 %v705, 0.0
    %v748 = vmax.f32 %v710, 0.0
    %v749 = vmax.f32 %v715, 0.0
    %v750 = vmax.f32 %v720, 0.0
    %v751 = vmax.f32 %v725, 0.0
    %v752 = vmax.f32 %v730, 0.0
    %v753 = vmax.f32 %v735, 0.0
    %vm754 = vcmp.ne.f32.partialorder %v660, %v660
    %vm755 = vcmp.ne.f32.partialorder %v665, %v665
    %vm756 = vcmp.ne.f32.partialorder %v670, %v670
    %vm757 = vcmp.ne.f32.partialorder %v675, %v675
    %vm758 = vcmp.ne.f32.partialorder %v680, %v680
    %vm759 = vcmp.ne.f32.partialorder %v685, %v685
    %vm760 = vcmp.ne.f32.partialorder %v690, %v690
    %vm761 = vcmp.ne.f32.partialorder %v695, %v695
    %vm762 = vcmp.ne.f32.partialorder %v700, %v700
    %vm763 = vcmp.ne.f32.partialorder %v705, %v705
    %vm764 = vcmp.ne.f32.partialorder %v710, %v710
    %vm765 = vcmp.ne.f32.partialorder %v715, %v715
    %vm766 = vcmp.ne.f32.partialorder %v720, %v720
    %vm767 = vcmp.ne.f32.partialorder %v725, %v725
    %vm768 = vcmp.ne.f32.partialorder %v730, %v730
    %vm769 = vcmp.ne.f32.partialorder %v735, %v735
    %v770 = vadd.f32 %v660, 0.0
    %v771 = vadd.f32 %v665, 0.0
    %v772 = vadd.f32 %v670, 0.0
    %v773 = vadd.f32 %v675, 0.0
    %v774 = vadd.f32 %v680, 0.0
    %v775 = vadd.f32 %v685, 0.0
    %v776 = vadd.f32 %v690, 0.0
    %v777 = vadd.f32 %v695, 0.0
    %v778 = vadd.f32 %v700, 0.0
    %v779 = vadd.f32 %v705, 0.0
    %v780 = vadd.f32 %v710, 0.0
    %v781 = vadd.f32 %v715, 0.0
    %v782 = vadd.f32 %v720, 0.0
    %v783 = vadd.f32 %v725, 0.0
    %v784 = vadd.f32 %v730, 0.0
    %v785 = vadd.f32 %v735, 0.0
    %v786 = vand.u32 2147483647, %v660
    %v787 = vand.u32 2147483647, %v665
    %v788 = vand.u32 2147483647, %v670
    %v789 = vand.u32 2147483647, %v675
    %v790 = vand.u32 2147483647, %v680
    %v791 = vand.u32 2147483647, %v685
    %v792 = vand.u32 2147483647, %v690
    %v793 = vand.u32 2147483647, %v695
    %v794 = vand.u32 2147483647, %v700
    %v795 = vand.u32 2147483647, %v705
    %v796 = vand.u32 2147483647, %v710
    %v797 = vand.u32 2147483647, %v715
    %v798 = vand.u32 2147483647, %v720
    %v799 = vand.u32 2147483647, %v725
    %v800 = vand.u32 2147483647, %v730
    %v801 = vand.u32 2147483647, %v735
    %v802 = vsub.f32 0.0, %v786
    %v803 = vsub.f32 0.0, %v787
    %v804 = vsub.f32 0.0, %v788
    %v805 = vsub.f32 0.0, %v789
    %v806 = vsub.f32 0.0, %v790
    %v807 = vsub.f32 0.0, %v791
    %v808 = vsub.f32 0.0, %v792
    %v809 = vsub.f32 0.0, %v793
    %v810 = vsub.f32 0.0, %v794
    %v811 = vsub.f32 0.0, %v795
    %v812 = vsub.f32 0.0, %v796
    %v813 = vsub.f32 0.0, %v797
    %v814 = vsub.f32 0.0, %v798
    %v815 = vsub.f32 0.0, %v799
    %v816 = vsub.f32 0.0, %v800
    %v817 = vsub.f32 0.0, %v801
    %v818 = vmul.f32 %v802, 1.442695
    %v819 = vpow.pop %v818
    %v820 = vmul.f32 %v803, 1.442695
    %v821 = vpow.pop %v820
    %v822 = vmul.f32 %v804, 1.442695
    %v823 = vpow.pop %v822
    %v824 = vmul.f32 %v805, 1.442695
    %v825 = vpow.pop %v824
    %v826 = vmul.f32 %v806, 1.442695
    %v827 = vpow.pop %v826
    %v828 = vmul.f32 %v807, 1.442695
    %v829 = vpow.pop %v828
    %v830 = vmul.f32 %v808, 1.442695
    %v831 = vpow.pop %v830
    %v832 = vmul.f32 %v809, 1.442695
    %v833 = vpow.pop %v832
    %v834 = vmul.f32 %v810, 1.442695
    %v835 = vpow.pop %v834
    %v836 = vmul.f32 %v811, 1.442695
    %v837 = vpow.pop %v836
    %v838 = vmul.f32 %v812, 1.442695
    %v839 = vpow.pop %v838
    %v840 = vmul.f32 %v813, 1.442695
    %v841 = vpow.pop %v840
    %v842 = vmul.f32 %v814, 1.442695
    %v843 = vpow.pop %v842
    %v844 = vmul.f32 %v815, 1.442695
    %v845 = vpow.pop %v844
    %v846 = vmul.f32 %v816, 1.442695
    %v847 = vpow.pop %v846
    %v848 = vmul.f32 %v817, 1.442695
    %v849 = vpow.pop %v848
    %v850 = vadd.f32 %v819, 1.0
    %v851 = vlog2.pop %v850
    %v852 = vmul.f32 %v851, 0.6931472
    %v853 = vmul.f32 -0.5, %v819
    %v854 = vadd.f32 %v853, 1.0
    %v855 = vmul.f32 %v854, %v819
    %v856 = vand.u32 2147483647, %v819
    %vm857 = vcmp.lt.f32.partialorder %v856, 0.0004427343
    %v858 = vsel %vm857, %v855, %v852
    %v859 = vadd.f32 %v821, 1.0
    %v860 = vlog2.pop %v859
    %v861 = vmul.f32 %v860, 0.6931472
    %v862 = vmul.f32 -0.5, %v821
    %v863 = vadd.f32 %v862, 1.0
    %v864 = vmul.f32 %v863, %v821
    %v865 = vand.u32 2147483647, %v821
    %vm866 = vcmp.lt.f32.partialorder %v865, 0.0004427343
    %v867 = vsel %vm866, %v864, %v861
    %v868 = vadd.f32 %v823, 1.0
    %v869 = vlog2.pop %v868
    %v870 = vmul.f32 %v869, 0.6931472
    %v871 = vmul.f32 -0.5, %v823
    %v872 = vadd.f32 %v871, 1.0
    %v873 = vmul.f32 %v872, %v823
    %v874 = vand.u32 2147483647, %v823
    %vm875 = vcmp.lt.f32.partialorder %v874, 0.0004427343
    %v876 = vsel %vm875, %v873, %v870
    %v877 = vadd.f32 %v825, 1.0
    %v878 = vlog2.pop %v877
    %v879 = vmul.f32 %v878, 0.6931472
    %v880 = vmul.f32 -0.5, %v825
    %v881 = vadd.f32 %v880, 1.0
    %v882 = vmul.f32 %v881, %v825
    %v883 = vand.u32 2147483647, %v825
    %vm884 = vcmp.lt.f32.partialorder %v883, 0.0004427343
    %v885 = vsel %vm884, %v882, %v879
    %v886 = vadd.f32 %v827, 1.0
    %v887 = vlog2.pop %v886
    %v888 = vmul.f32 %v887, 0.6931472
    %v889 = vmul.f32 -0.5, %v827
    %v890 = vadd.f32 %v889, 1.0
    %v891 = vmul.f32 %v890, %v827
    %v892 = vand.u32 2147483647, %v827
    %vm893 = vcmp.lt.f32.partialorder %v892, 0.0004427343
    %v894 = vsel %vm893, %v891, %v888
    %v895 = vadd.f32 %v829, 1.0
    %v896 = vlog2.pop %v895
    %v897 = vmul.f32 %v896, 0.6931472
    %v898 = vmul.f32 -0.5, %v829
    %v899 = vadd.f32 %v898, 1.0
    %v900 = vmul.f32 %v899, %v829
    %v901 = vand.u32 2147483647, %v829
    %vm902 = vcmp.lt.f32.partialorder %v901, 0.0004427343
    %v903 = vsel %vm902, %v900, %v897
    %v904 = vadd.f32 %v831, 1.0
    %v905 = vlog2.pop %v904
    %v906 = vmul.f32 %v905, 0.6931472
    %v907 = vmul.f32 -0.5, %v831
    %v908 = vadd.f32 %v907, 1.0
    %v909 = vmul.f32 %v908, %v831
    %v910 = vand.u32 2147483647, %v831
    %vm911 = vcmp.lt.f32.partialorder %v910, 0.0004427343
    %v912 = vsel %vm911, %v909, %v906
    %v913 = vadd.f32 %v833, 1.0
    %v914 = vlog2.pop %v913
    %v915 = vmul.f32 %v914, 0.6931472
    %v916 = vmul.f32 -0.5, %v833
    %v917 = vadd.f32 %v916, 1.0
    %v918 = vmul.f32 %v917, %v833
    %v919 = vand.u32 2147483647, %v833
    %vm920 = vcmp.lt.f32.partialorder %v919, 0.0004427343
    %v921 = vsel %vm920, %v918, %v915
    %v922 = vadd.f32 %v835, 1.0
    %v923 = vlog2.pop %v922
    %v924 = vmul.f32 %v923, 0.6931472
    %v925 = vmul.f32 -0.5, %v835
    %v926 = vadd.f32 %v925, 1.0
    %v927 = vmul.f32 %v926, %v835
    %v928 = vand.u32 2147483647, %v835
    %vm929 = vcmp.lt.f32.partialorder %v928, 0.0004427343
    %v930 = vsel %vm929, %v927, %v924
    %v931 = vadd.f32 %v837, 1.0
    %v932 = vlog2.pop %v931
    %v933 = vmul.f32 %v932, 0.6931472
    %v934 = vmul.f32 -0.5, %v837
    %v935 = vadd.f32 %v934, 1.0
    %v936 = vmul.f32 %v935, %v837
    %v937 = vand.u32 2147483647, %v837
    %vm938 = vcmp.lt.f32.partialorder %v937, 0.0004427343
    %v939 = vsel %vm938, %v936, %v933
    %v940 = vadd.f32 %v839, 1.0
    %v941 = vlog2.pop %v940
    %v942 = vmul.f32 %v941, 0.6931472
    %v943 = vmul.f32 -0.5, %v839
    %v944 = vadd.f32 %v943, 1.0
    %v945 = vmul.f32 %v944, %v839
    %v946 = vand.u32 2147483647, %v839
    %vm947 = vcmp.lt.f32.partialorder %v946, 0.0004427343
    %v948 = vsel %vm947, %v945, %v942
    %v949 = vadd.f32 %v841, 1.0
    %v950 = vlog2.pop %v949
    %v951 = vmul.f32 %v950, 0.6931472
    %v952 = vmul.f32 -0.5, %v841
    %v953 = vadd.f32 %v952, 1.0
    %v954 = vmul.f32 %v953, %v841
    %v955 = vand.u32 2147483647, %v841
    %vm956 = vcmp.lt.f32.partialorder %v955, 0.0004427343
    %v957 = vsel %vm956, %v954, %v951
    %v958 = vadd.f32 %v843, 1.0
    %v959 = vlog2.pop %v958
    %v960 = vmul.f32 %v959, 0.6931472
    %v961 = vmul.f32 -0.5, %v843
    %v962 = vadd.f32 %v961, 1.0
    %v963 = vmul.f32 %v962, %v843
    %v964 = vand.u32 2147483647, %v843
    %vm965 = vcmp.lt.f32.partialorder %v964, 0.0004427343
    %v966 = vsel %vm965, %v963, %v960
    %v967 = vadd.f32 %v845, 1.0
    %v968 = vlog2.pop %v967
    %v969 = vmul.f32 %v968, 0.6931472
    %v970 = vmul.f32 -0.5, %v845
    %v971 = vadd.f32 %v970, 1.0
    %v972 = vmul.f32 %v971, %v845
    %v973 = vand.u32 2147483647, %v845
    %vm974 = vcmp.lt.f32.partialorder %v973, 0.0004427343
    %v975 = vsel %vm974, %v972, %v969
    %v976 = vadd.f32 %v847, 1.0
    %v977 = vlog2.pop %v976
    %v978 = vmul.f32 %v977, 0.6931472
    %v979 = vmul.f32 -0.5, %v847
    %v980 = vadd.f32 %v979, 1.0
    %v981 = vmul.f32 %v980, %v847
    %v982 = vand.u32 2147483647, %v847
    %vm983 = vcmp.lt.f32.partialorder %v982, 0.0004427343
    %v984 = vsel %vm983, %v981, %v978
    %v985 = vadd.f32 %v849, 1.0
    %v986 = vlog2.pop %v985
    %v987 = vmul.f32 %v986, 0.6931472
    %v988 = vmul.f32 -0.5, %v849
    %v989 = vadd.f32 %v988, 1.0
    %v990 = vmul.f32 %v989, %v849
    %v991 = vand.u32 2147483647, %v849
    %vm992 = vcmp.lt.f32.partialorder %v991, 0.0004427343
    %v993 = vsel %vm992, %v990, %v987
    %v994 = vadd.f32 %v738, %v858
    %v995 = vadd.f32 %v739, %v867
    %v996 = vadd.f32 %v740, %v876
    %v997 = vadd.f32 %v741, %v885
    %v998 = vadd.f32 %v742, %v894
    %v999 = vadd.f32 %v743, %v903
    %v1000 = vadd.f32 %v744, %v912
    %v1001 = vadd.f32 %v745, %v921
    %v1002 = vadd.f32 %v746, %v930
    %v1003 = vadd.f32 %v747, %v939
    %v1004 = vadd.f32 %v748, %v948
    %v1005 = vadd.f32 %v749, %v957
    %v1006 = vadd.f32 %v750, %v966
    %v1007 = vadd.f32 %v751, %v975
    %v1008 = vadd.f32 %v752, %v984
    %v1009 = vadd.f32 %v753, %v993
    %v1010 = vsel %vm754, %v770, %v994
    %v1011 = vsel %vm755, %v771, %v995
    %v1012 = vsel %vm756, %v772, %v996
    %v1013 = vsel %vm757, %v773, %v997
    %v1014 = vsel %vm758, %v774, %v998
    %v1015 = vsel %vm759, %v775, %v999
    %v1016 = vsel %vm760, %v776, %v1000
    %v1017 = vsel %vm761, %v777, %v1001
    %v1018 = vsel %vm762, %v778, %v1002
    %v1019 = vsel %vm763, %v779, %v1003
    %v1020 = vsel %vm764, %v780, %v1004
    %v1021 = vsel %vm765, %v781, %v1005
    %v1022 = vsel %vm766, %v782, %v1006
    %v1023 = vsel %vm767, %v783, %v1007
    %v1024 = vsel %vm768, %v784, %v1008
    %v1025 = vsel %vm769, %v785, %v1009
    %v1026 = vsub.f32 %v1010, 0.6931472
    %v1027 = vsub.f32 %v1011, 0.6931472
    %v1028 = vsub.f32 %v1012, 0.6931472
    %v1029 = vsub.f32 %v1013, 0.6931472
    %v1030 = vsub.f32 %v1014, 0.6931472
    %v1031 = vsub.f32 %v1015, 0.6931472
    %v1032 = vsub.f32 %v1016, 0.6931472
    %v1033 = vsub.f32 %v1017, 0.6931472
    %v1034 = vsub.f32 %v1018, 0.6931472
    %v1035 = vsub.f32 %v1019, 0.6931472
    %v1036 = vsub.f32 %v1020, 0.6931472
    %v1037 = vsub.f32 %v1021, 0.6931472
    %v1038 = vsub.f32 %v1022, 0.6931472
    %v1039 = vsub.f32 %v1023, 0.6931472
    %v1040 = vsub.f32 %v1024, 0.6931472
    %v1041 = vsub.f32 %v1025, 0.6931472
    %v1042 = vld [vmem:[#allocation8] sm:$0xff]
    %v1043 = vld [vmem:[#allocation8 + $0x8] sm:$0xff]
    %v1044 = vld [vmem:[#allocation8 + $0x10] sm:$0xff]
    %v1045 = vld [vmem:[#allocation8 + $0x18] sm:$0xff]
    %v1046 = vld [vmem:[#allocation8 + $0x20] sm:$0xff]
    %v1047 = vld [vmem:[#allocation8 + $0x28] sm:$0xff]
    %v1048 = vld [vmem:[#allocation8 + $0x30] sm:$0xff]
    %v1049 = vld [vmem:[#allocation8 + $0x38] sm:$0xff]
    %v1050 = vld [vmem:[#allocation8 + $0x40] sm:$0xff]
    %v1051 = vld [vmem:[#allocation8 + $0x48] sm:$0xff]
    %v1052 = vld [vmem:[#allocation8 + $0x50] sm:$0xff]
    %v1053 = vld [vmem:[#allocation8 + $0x58] sm:$0xff]
    %v1054 = vld [vmem:[#allocation8 + $0x60] sm:$0xff]
    %v1055 = vld [vmem:[#allocation8 + $0x68] sm:$0xff]
    %v1056 = vld [vmem:[#allocation8 + $0x70] sm:$0xff]
    %v1057 = vld [vmem:[#allocation8 + $0x78] sm:$0xff]
    %v1058 = vld [vmem:[%s6] sm:$0x1]
    %v1060 = vlaneseq
    %v1061 = vshrl.u32 %v1060, 7
    %v1062 = vsub.s32 0, %v1061
    %v1063 = vrot.slane %v1058, %v1062
    %1065 = vmatprep.subr.mxu0 0.0
    %1066 = vmatpush1.msra.mxu0 %v1042
    %1067 = vmatprep.subr.mxu0 0.0
    %1068 = vmatpush1.msra.mxu0 %v1043
    %1069 = vmatprep.subr.mxu0 0.0
    %1070 = vmatpush1.msra.mxu0 %v1044
    %1071 = vmatprep.subr.mxu0 0.0
    %1072 = vmatpush1.msra.mxu0 %v1045
    %1073 = vmatprep.subr.mxu0 0.0
    %1074 = vmatpush1.msra.mxu0 %v1046
    %1075 = vmatprep.subr.mxu0 0.0
    %1076 = vmatpush1.msra.mxu0 %v1047
    %1077 = vmatprep.subr.mxu0 0.0
    %1078 = vmatpush1.msra.mxu0 %v1048
    %1079 = vmatprep.subr.mxu0 0.0
    %1080 = vmatpush1.msra.mxu0 %v1049
    %1081 = vmatprep.subr.mxu0 0.0
    %1082 = vmatpush1.msra.mxu0 %v1050
    %1083 = vmatprep.subr.mxu0 0.0
    %1084 = vmatpush1.msra.mxu0 %v1051
    %1085 = vmatprep.subr.mxu0 0.0
    %1086 = vmatpush1.msra.mxu0 %v1052
    %1087 = vmatprep.subr.mxu0 0.0
    %1088 = vmatpush1.msra.mxu0 %v1053
    %1089 = vmatprep.subr.mxu0 0.0
    %1090 = vmatpush1.msra.mxu0 %v1054
    %1091 = vmatprep.subr.mxu0 0.0
    %1092 = vmatpush1.msra.mxu0 %v1055
    %1093 = vmatprep.subr.mxu0 0.0
    %1094 = vmatpush1.msra.mxu0 %v1056
    %1095 = vmatprep.subr.mxu0 0.0
    %1096 = vmatpush1.msra.mxu0 %v1057
    %1097 = vmatprep.subr.mxu0 0.0
    %1098 = vmatpush1.msra.mxu0 0.0
    %1099 = vmatprep.subr.mxu0 0.0
    %1100 = vmatpush1.msra.mxu0 0.0
    %1101 = vmatprep.subr.mxu0 0.0
    %1102 = vmatpush1.msra.mxu0 0.0
    %1103 = vmatprep.subr.mxu0 0.0
    %1104 = vmatpush1.msra.mxu0 0.0
    %1105 = vmatprep.subr.mxu0 0.0
    %1106 = vmatpush1.msra.mxu0 0.0
    %1107 = vmatprep.subr.mxu0 0.0
    %1108 = vmatpush1.msra.mxu0 0.0
    %1109 = vmatprep.subr.mxu0 0.0
    %1110 = vmatpush1.msra.mxu0 0.0
    %1111 = vmatprep.subr.mxu0 0.0
    %1112 = vmatpush1.msra.mxu0 0.0
    %1113 = vmatprep.subr.mxu0 0.0
    %1114 = vmatpush1.msra.mxu0 0.0
    %1115 = vmatprep.subr.mxu0 0.0
    %1116 = vmatpush1.msra.mxu0 0.0
    %1117 = vmatprep.subr.mxu0 0.0
    %1118 = vmatpush1.msra.mxu0 0.0
    %1119 = vmatprep.subr.mxu0 0.0
    %1120 = vmatpush1.msra.mxu0 0.0
    %1121 = vmatprep.subr.mxu0 0.0
    %1122 = vmatpush1.msra.mxu0 0.0
    %1123 = vmatprep.subr.mxu0 0.0
    %1124 = vmatpush1.msra.mxu0 0.0
    %1125 = vmatprep.subr.mxu0 0.0
    %1126 = vmatpush1.msra.mxu0 0.0
    %1127 = vmatprep.subr.mxu0 0.0
    %1128 = vmatpush1.msra.mxu0 0.0
    %1129 = vmatprep.mubr.f32.mxu0 0.0
    %1130 = vmatmul.mubr.f32.gmra.mrb[0].mxu0 %v1026
    %v1131 = vpop.f32.mrb[0].mxu0
    %v1132 = vadd.f32 %v1063, %v1131
    %v1133 = vpop.f32.mrb[0].mxu0
    %1134 = vmatprep.mubr.f32.mxu0 0.0
    %1135 = vmatmul.mubr.f32.gmra.mrb[0].mxu0 %v1027
    %v1136 = vpop.f32.mrb[0].mxu0
    %v1137 = vadd.f32 %v1063, %v1136
    %v1138 = vpop.f32.mrb[0].mxu0
    %1139 = vmatprep.mubr.f32.mxu0 0.0
    %1140 = vmatmul.mubr.f32.gmra.mrb[0].mxu0 %v1028
    %v1141 = vpop.f32.mrb[0].mxu0
    %v1142 = vadd.f32 %v1063, %v1141
    %v1143 = vpop.f32.mrb[0].mxu0
    %1144 = vmatprep.mubr.f32.mxu0 0.0
    %1145 = vmatmul.mubr.f32.gmra.mrb[0].mxu0 %v1029
    %v1146 = vpop.f32.mrb[0].mxu0
    %v1147 = vadd.f32 %v1063, %v1146
    %v1148 = vpop.f32.mrb[0].mxu0
    %1149 = vmatprep.mubr.f32.mxu0 0.0
    %1150 = vmatmul.mubr.f32.gmra.mrb[0].mxu0 %v1030
    %v1151 = vpop.f32.mrb[0].mxu0
    %v1152 = vadd.f32 %v1063, %v1151
    %v1153 = vpop.f32.mrb[0].mxu0
    %1154 = vmatprep.mubr.f32.mxu0 0.0
    %1155 = vmatmul.mubr.f32.gmra.mrb[0].mxu0 %v1031
    %v1156 = vpop.f32.mrb[0].mxu0
    %v1157 = vadd.f32 %v1063, %v1156
    %v1158 = vpop.f32.mrb[0].mxu0
    %1159 = vmatprep.mubr.f32.mxu0 0.0
    %1160 = vmatmul.mubr.f32.gmra.mrb[0].mxu0 %v1032
    %v1161 = vpop.f32.mrb[0].mxu0
    %v1162 = vadd.f32 %v1063, %v1161
    %v1163 = vpop.f32.mrb[0].mxu0
    %1164 = vmatprep.mubr.f32.mxu0 0.0
    %1165 = vmatmul.mubr.f32.gmra.mrb[0].mxu0 %v1033
    %v1166 = vpop.f32.mrb[0].mxu0
    %v1167 = vadd.f32 %v1063, %v1166
    %v1168 = vpop.f32.mrb[0].mxu0
    %1169 = vmatprep.mubr.f32.mxu0 0.0
    %1170 = vmatmul.mubr.f32.gmra.mrb[0].mxu0 %v1034
    %v1171 = vpop.f32.mrb[0].mxu0
    %v1172 = vadd.f32 %v1063, %v1171
    %v1173 = vpop.f32.mrb[0].mxu0
    %1174 = vmatprep.mubr.f32.mxu0 0.0
    %1175 = vmatmul.mubr.f32.gmra.mrb[0].mxu0 %v1035
    %v1176 = vpop.f32.mrb[0].mxu0
    %v1177 = vadd.f32 %v1063, %v1176
    %v1178 = vpop.f32.mrb[0].mxu0
    %1179 = vmatprep.mubr.f32.mxu0 0.0
    %1180 = vmatmul.mubr.f32.gmra.mrb[0].mxu0 %v1036
    %v1181 = vpop.f32.mrb[0].mxu0
    %v1182 = vadd.f32 %v1063, %v1181
    %v1183 = vpop.f32.mrb[0].mxu0
    %1184 = vmatprep.mubr.f32.mxu0 0.0
    %1185 = vmatmul.mubr.f32.gmra.mrb[0].mxu0 %v1037
    %v1186 = vpop.f32.mrb[0].mxu0
    %v1187 = vadd.f32 %v1063, %v1186
    %v1188 = vpop.f32.mrb[0].mxu0
    %1189 = vmatprep.mubr.f32.mxu0 0.0
    %1190 = vmatmul.mubr.f32.gmra.mrb[0].mxu0 %v1038
    %v1191 = vpop.f32.mrb[0].mxu0
    %v1192 = vadd.f32 %v1063, %v1191
    %v1193 = vpop.f32.mrb[0].mxu0
    %1194 = vmatprep.mubr.f32.mxu0 0.0
    %1195 = vmatmul.mubr.f32.gmra.mrb[0].mxu0 %v1039
    %v1196 = vpop.f32.mrb[0].mxu0
    %v1197 = vadd.f32 %v1063, %v1196
    %v1198 = vpop.f32.mrb[0].mxu0
    %1199 = vmatprep.mubr.f32.mxu0 0.0
    %1200 = vmatmul.mubr.f32.gmra.mrb[0].mxu0 %v1040
    %v1201 = vpop.f32.mrb[0].mxu0
    %v1202 = vadd.f32 %v1063, %v1201
    %v1203 = vpop.f32.mrb[0].mxu0
    %1204 = vmatprep.mubr.f32.mxu0 0.0
    %1205 = vmatmul.mubr.f32.gmra.mrb[0].mxu0 %v1041
    %v1206 = vpop.f32.mrb[0].mxu0
    %v1207 = vadd.f32 %v1063, %v1206
    %v1208 = vpop.f32.mrb[0].mxu0
    %1209 = vdwg.mxu0
    %1210 = vxpose.xlu0.b32.start [1/16] %v1132, 128
    %1211 = vxpose.xlu0.b32.cont [2/16] %v1137, 128
    %1212 = vxpose.xlu0.b32.cont [3/16] %v1142, 128
    %1213 = vxpose.xlu0.b32.cont [4/16] %v1147, 128
    %1214 = vxpose.xlu0.b32.cont [5/16] %v1152, 128
    %1215 = vxpose.xlu0.b32.cont [6/16] %v1157, 128
    %1216 = vxpose.xlu0.b32.cont [7/16] %v1162, 128
    %1217 = vxpose.xlu0.b32.cont [8/16] %v1167, 128
    %1218 = vxpose.xlu0.b32.cont [9/16] %v1172, 128
    %1219 = vxpose.xlu0.b32.cont [10/16] %v1177, 128
    %1220 = vxpose.xlu0.b32.cont [11/16] %v1182, 128
    %1221 = vxpose.xlu0.b32.cont [12/16] %v1187, 128
    %1222 = vxpose.xlu0.b32.cont [13/16] %v1192, 128
    %1223 = vxpose.xlu0.b32.cont [14/16] %v1197, 128
    %1224 = vxpose.xlu0.b32.cont [15/16] %v1202, 128
    %1225 = vxpose.xlu0.b32.end [16/16] %v1207, 128
    %v1226 = vpop.trf.xlu0
    %v1227 = vpop.trf.xlu0
    %v1228 = vpop.trf.xlu0
    %v1229 = vpop.trf.xlu0
    %v1230 = vpop.trf.xlu0
    %v1231 = vpop.trf.xlu0
    %v1232 = vpop.trf.xlu0
    %v1233 = vpop.trf.xlu0
    %v1234 = vpop.trf.xlu0
    %v1235 = vpop.trf.xlu0
    %v1236 = vpop.trf.xlu0
    %v1237 = vpop.trf.xlu0
    %v1238 = vpop.trf.xlu0
    %v1239 = vpop.trf.xlu0
    %v1240 = vpop.trf.xlu0
    %v1241 = vpop.trf.xlu0
    %1242 = vst [vmem:[#allocation10] sm:$0xff] %v1226
    // Predicated region
    $region46: #{tpu_custom_call.1} parent=1 // pred_check
      _
    $region47: #{tpu_custom_call.1} parent=1 // pred_check_branch
      %1244 = sbr.rel (0) target = $region49
    $region48: #{tpu_custom_call.1} parent=1 // pred_region
      %s1246 = ssub.s32 128, 128
      %1247 = vsyncadd [#allocation4], %s1246
      %s1249 = sshll.u32 [#allocation10], 4
      %s1250 = int_to_ptr.vmem [resolvable:$true] %s1249
      %1252 = dma.vmem_to_hbm [thread:$0]  %s1250, 128, %s7, [#allocation4]
    $region49: #{tpu_custom_call.1} parent=1 // pred_fallthru
      _
    // Predicated region
    $region50: #{tpu_custom_call.1} parent=1 // pred_check
      _
    $region51: #{tpu_custom_call.1} parent=1 // pred_check_branch
      %1254 = sbr.rel (0) target = $region53
    $region52: #{tpu_custom_call.1} parent=1 // pred_region
      %1255 = dma.done [#allocation4], 128
    $region53: #{tpu_custom_call.1} parent=1 // pred_fallthru
      _
    %1256 = vsyncpa [#allocation3], 1
    %1257 = vsyncpa [#allocation6], 1
    %1258 = vsyncpa [#allocation9], 1
    %1259 = vsyncpa [#allocation4], 1

// kernel: tpu_custom_call.1
$region0: #{tpu_custom_call.1}
  #allocation0 [shape = 'u32[]', space=smem, size = 0x4, offset = 0x4, fixed_abs, tag = 'smem constant byte address 0x4 - core index']
  #allocation1 [shape = 'u32[144,128]{1,0:T(1,128)}', space=vmem, size = 0x12000, scoped, tag = 'internal scratch']
  %s0 = inlined_call_operand.hbm [shape: f32[128,128], index: 0, kind: input, shape index: {}]
  %s1 = inlined_call_operand.hbm [shape: f32[128,128], index: 1, kind: input, shape index: {}]
  %s2 = inlined_call_operand.vmem [shape: f32[1,128], index: 2, kind: input, shape index: {}]
  %s3 = inlined_call_operand.hbm [shape: f32[128,128], index: 3, kind: input, shape index: {}]
  %s4 = inlined_call_operand.vmem [shape: f32[1,128], index: 4, kind: input, shape index: {}]
  %s5 = inlined_call_operand.hbm [shape: f32[128,128], index: 5, kind: input, shape index: {}]
  %s6 = inlined_call_operand.vmem [shape: f32[1,128], index: 6, kind: input, shape index: {}]
  %s7 = inlined_call_operand.hbm [shape: f32[8,128], index: 7, kind: output, shape index: {}]
  %s8 = sld [smem:[#allocation0]]
  $region54: #{tpu_custom_call.1} parent=0
    _
  %s10 = ssub.s32 1, %s8
  %s11 = scalar_select 0, %s10, %s8
  $region1: #{tpu_custom_call.1} parent=0
    #allocation2 [shape = 'u8[65536]{0}', space=vmem, size = 0x10000, scoped, tag = 'input window, operand 0, single buffered']
    #allocation3 [shape = 's32[1]{0}', space=sflag, size = 0x4, scoped, tag = 'scoped memory for tpu_custom_call.1']
    #allocation4 [shape = 's32[1]{0}', space=sflag, size = 0x4, scoped, tag = 'scoped memory for tpu_custom_call.1']
    #allocation5 [shape = 'u8[65536]{0}', space=vmem, size = 0x10000, scoped, tag = 'input window, operand 1, single buffered']
    #allocation6 [shape = 's32[1]{0}', space=sflag, size = 0x4, scoped, tag = 'scoped memory for tpu_custom_call.1']
    #allocation7 [shape = 'u8[65536]{0}', space=vmem, size = 0x10000, scoped, tag = 'input window, operand 3, single buffered']
    #allocation8 [shape = 'u8[65536]{0}', space=vmem, size = 0x10000, scoped, tag = 'input window, operand 5, single buffered']
    #allocation9 [shape = 's32[1]{0}', space=sflag, size = 0x4, scoped, tag = 'scoped memory for tpu_custom_call.1']
    #allocation10 [shape = 'u8[4096]{0}', space=vmem, size = 0x1000, scoped, tag = 'output window, operand 0, single buffered']
    %12 = vsyncpa [#allocation3], 0
    %13 = vsyncpa [#allocation6], 0
    %14 = vsyncpa [#allocation9], 0
    %15 = vsyncpa [#allocation4], 0
    // Predicated region
    $region2: #{tpu_custom_call.1} parent=1 // pred_check
      _
    $region3: #{tpu_custom_call.1} parent=1 // pred_check_branch
      %17 = sbr.rel (0) target = $region5
    $region4: #{tpu_custom_call.1} parent=1 // pred_region
      %s19 = ssub.s32 2048, 2048
      %20 = vsyncadd [#allocation3], %s19
      %s21 = sshll.u32 [#allocation2], 4
      %s22 = int_to_ptr.vmem [resolvable:$true] %s21
      %27 = dma.hbm_to_vmem [thread:$0]  %s0, 2048, %s22, [#allocation3], 128, 128, 8
    $region5: #{tpu_custom_call.1} parent=1 // pred_fallthru
      _
    // Predicated region
    $region6: #{tpu_custom_call.1} parent=1 // pred_check
      _
    $region7: #{tpu_custom_call.1} parent=1 // pred_check_branch
      %29 = sbr.rel (0) target = $region9
    $region8: #{tpu_custom_call.1} parent=1 // pred_region
      %s31 = ssub.s32 2048, 2048
      %32 = vsyncadd [#allocation6], %s31
      %s33 = sshll.u32 [#allocation5], 4
      %s34 = int_to_ptr.vmem [resolvable:$true] %s33
      %39 = dma.hbm_to_vmem [thread:$0]  %s1, 2048, %s34, [#allocation6], 128, 128, 8
    $region9: #{tpu_custom_call.1} parent=1 // pred_fallthru
      _
    // Predicated region
    $region10: #{tpu_custom_call.1} parent=1 // pred_check
      _
    $region11: #{tpu_custom_call.1} parent=1 // pred_check_branch
      %41 = sbr.rel (0) target = $region13
    $region12: #{tpu_custom_call.1} parent=1 // pred_region
      _
    $region13: #{tpu_custom_call.1} parent=1 // pred_fallthru
      _
    // Predicated region
    $region14: #{tpu_custom_call.1} parent=1 // pred_check
      _
    $region15: #{tpu_custom_call.1} parent=1 // pred_check_branch
      %43 = sbr.rel (0) target = $region17
    $region16: #{tpu_custom_call.1} parent=1 // pred_region
      %s45 = ssub.s32 2048, 2048
      %46 = vsyncadd [#allocation6], %s45
      %s47 = sshll.u32 [#allocation7], 4
      %s48 = int_to_ptr.vmem [resolvable:$true] %s47
      %53 = dma.hbm_to_vmem [thread:$0]  %s3, 2048, %s48, [#allocation6], 128, 128, 8
    $region17: #{tpu_custom_call.1} parent=1 // pred_fallthru
      _
    // Predicated region
    $region18: #{tpu_custom_call.1} parent=1 // pred_check
      _
    $region19: #{tpu_custom_call.1} parent=1 // pred_check_branch
      %55 = sbr.rel (0) target = $region21
    $region20: #{tpu_custom_call.1} parent=1 // pred_region
      _
    $region21: #{tpu_custom_call.1} parent=1 // pred_fallthru
      _
    // Predicated region
    $region22: #{tpu_custom_call.1} parent=1 // pred_check
      _
    $region23: #{tpu_custom_call.1} parent=1 // pred_check_branch
      %57 = sbr.rel (0) target = $region25
    $region24: #{tpu_custom_call.1} parent=1 // pred_region
      %s59 = ssub.s32 2048, 2048
      %60 = vsyncadd [#allocation9], %s59
      %s61 = sshll.u32 [#allocation8], 4
      %s62 = int_to_ptr.vmem [resolvable:$true] %s61
      %67 = dma.hbm_to_vmem [thread:$0]  %s5, 2048, %s62, [#allocation9], 128, 128, 8
    $region25: #{tpu_custom_call.1} parent=1 // pred_fallthru
      _
    // Predicated region
    $region26: #{tpu_custom_call.1} parent=1 // pred_check
      _
    $region27: #{tpu_custom_call.1} parent=1 // pred_check_branch
      %69 = sbr.rel (0) target = $region29
    $region28: #{tpu_custom_call.1} parent=1 // pred_region
      _
    $region29: #{tpu_custom_call.1} parent=1 // pred_fallthru
      _
    // Predicated region
    $region30: #{tpu_custom_call.1} parent=1 // pred_check
      _
    $region31: #{tpu_custom_call.1} parent=1 // pred_check_branch
      %71 = sbr.rel (0) target = $region33
    $region32: #{tpu_custom_call.1} parent=1 // pred_region
      %72 = dma.done [#allocation3], 2048
    $region33: #{tpu_custom_call.1} parent=1 // pred_fallthru
      _
    // Predicated region
    $region34: #{tpu_custom_call.1} parent=1 // pred_check
      _
    $region35: #{tpu_custom_call.1} parent=1 // pred_check_branch
      %74 = sbr.rel (0) target = $region37
    $region36: #{tpu_custom_call.1} parent=1 // pred_region
      %75 = dma.done [#allocation6], 2048
    $region37: #{tpu_custom_call.1} parent=1 // pred_fallthru
      _
    // Predicated region
    $region38: #{tpu_custom_call.1} parent=1 // pred_check
      _
    $region39: #{tpu_custom_call.1} parent=1 // pred_check_branch
      %77 = sbr.rel (0) target = $region41
    $region40: #{tpu_custom_call.1} parent=1 // pred_region
      %78 = dma.done [#allocation6], 2048
    $region41: #{tpu_custom_call.1} parent=1 // pred_fallthru
      _
    // Predicated region
    $region42: #{tpu_custom_call.1} parent=1 // pred_check
      _
    $region43: #{tpu_custom_call.1} parent=1 // pred_check_branch
      %80 = sbr.rel (0) target = $region45
    $region44: #{tpu_custom_call.1} parent=1 // pred_region
      %81 = dma.done [#allocation9], 2048
    $region45: #{tpu_custom_call.1} parent=1 // pred_fallthru
      _
    %v82 = vld [vmem:[#allocation2] sm:$0xff]
    %v83 = vld [vmem:[#allocation2 + $0x8] sm:$0xff]
    %v84 = vld [vmem:[#allocation2 + $0x10] sm:$0xff]
    %v85 = vld [vmem:[#allocation2 + $0x18] sm:$0xff]
    %v86 = vld [vmem:[#allocation2 + $0x20] sm:$0xff]
    %v87 = vld [vmem:[#allocation2 + $0x28] sm:$0xff]
    %v88 = vld [vmem:[#allocation2 + $0x30] sm:$0xff]
    %v89 = vld [vmem:[#allocation2 + $0x38] sm:$0xff]
    %v90 = vld [vmem:[#allocation2 + $0x40] sm:$0xff]
    %v91 = vld [vmem:[#allocation2 + $0x48] sm:$0xff]
    %v92 = vld [vmem:[#allocation2 + $0x50] sm:$0xff]
    %v93 = vld [vmem:[#allocation2 + $0x58] sm:$0xff]
    %v94 = vld [vmem:[#allocation2 + $0x60] sm:$0xff]
    %v95 = vld [vmem:[#allocation2 + $0x68] sm:$0xff]
    %v96 = vld [vmem:[#allocation2 + $0x70] sm:$0xff]
    %v97 = vld [vmem:[#allocation2 + $0x78] sm:$0xff]
    %v98 = vld [vmem:[#allocation5] sm:$0xff]
    %v99 = vld [vmem:[#allocation5 + $0x8] sm:$0xff]
    %v100 = vld [vmem:[#allocation5 + $0x10] sm:$0xff]
    %v101 = vld [vmem:[#allocation5 + $0x18] sm:$0xff]
    %v102 = vld [vmem:[#allocation5 + $0x20] sm:$0xff]
    %v103 = vld [vmem:[#allocation5 + $0x28] sm:$0xff]
    %v104 = vld [vmem:[#allocation5 + $0x30] sm:$0xff]
    %v105 = vld [vmem:[#allocation5 + $0x38] sm:$0xff]
    %v106 = vld [vmem:[#allocation5 + $0x40] sm:$0xff]
    %v107 = vld [vmem:[#allocation5 + $0x48] sm:$0xff]
    %v108 = vld [vmem:[#allocation5 + $0x50] sm:$0xff]
    %v109 = vld [vmem:[#allocation5 + $0x58] sm:$0xff]
    %v110 = vld [vmem:[#allocation5 + $0x60] sm:$0xff]
    %v111 = vld [vmem:[#allocation5 + $0x68] sm:$0xff]
    %v112 = vld [vmem:[#allocation5 + $0x70] sm:$0xff]
    %v113 = vld [vmem:[#allocation5 + $0x78] sm:$0xff]
    %v114 = vld [vmem:[%s2] sm:$0x1]
    %v116 = vlaneseq
    %v117 = vshrl.u32 %v116, 7
    %v118 = vsub.s32 0, %v117
    %v119 = vrot.slane %v114, %v118
    %121 = vmatprep.subr.mxu0 0.0
    %122 = vmatpush1.msra.mxu0 %v98
    %123 = vmatprep.subr.mxu0 0.0
    %124 = vmatpush1.msra.mxu0 %v99
    %125 = vmatprep.subr.mxu0 0.0
    %126 = vmatpush1.msra.mxu0 %v100
    %127 = vmatprep.subr.mxu0 0.0
    %128 = vmatpush1.msra.mxu0 %v101
    %129 = vmatprep.subr.mxu0 0.0
    %130 = vmatpush1.msra.mxu0 %v102
    %131 = vmatprep.subr.mxu0 0.0
    %132 = vmatpush1.msra.mxu0 %v103
    %133 = vmatprep.subr.mxu0 0.0
    %134 = vmatpush1.msra.mxu0 %v104
    %135 = vmatprep.subr.mxu0 0.0
    %136 = vmatpush1.msra.mxu0 %v105
    %137 = vmatprep.subr.mxu0 0.0
    %138 = vmatpush1.msra.mxu0 %v106
    %139 = vmatprep.subr.mxu0 0.0
    %140 = vmatpush1.msra.mxu0 %v107
    %141 = vmatprep.subr.mxu0 0.0
    %142 = vmatpush1.msra.mxu0 %v108
    %143 = vmatprep.subr.mxu0 0.0
    %144 = vmatpush1.msra.mxu0 %v109
    %145 = vmatprep.subr.mxu0 0.0
    %146 = vmatpush1.msra.mxu0 %v110
    %147 = vmatprep.subr.mxu0 0.0
    %148 = vmatpush1.msra.mxu0 %v111
    %149 = vmatprep.subr.mxu0 0.0
    %150 = vmatpush1.msra.mxu0 %v112
    %151 = vmatprep.subr.mxu0 0.0
    %152 = vmatpush1.msra.mxu0 %v113
    %153 = vmatprep.subr.mxu0 0.0
    %154 = vmatpush1.msra.mxu0 0.0
    %155 = vmatprep.subr.mxu0 0.0
    %156 = vmatpush1.msra.mxu0 0.0
    %157 = vmatprep.subr.mxu0 0.0
    %158 = vmatpush1.msra.mxu0 0.0
    %159 = vmatprep.subr.mxu0 0.0
    %160 = vmatpush1.msra.mxu0 0.0
    %161 = vmatprep.subr.mxu0 0.0
    %162 = vmatpush1.msra.mxu0 0.0
    %163 = vmatprep.subr.mxu0 0.0
    %164 = vmatpush1.msra.mxu0 0.0
    %165 = vmatprep.subr.mxu0 0.0
    %166 = vmatpush1.msra.mxu0 0.0
    %167 = vmatprep.subr.mxu0 0.0
    %168 = vmatpush1.msra.mxu0 0.0
    %169 = vmatprep.subr.mxu0 0.0
    %170 = vmatpush1.msra.mxu0 0.0
    %171 = vmatprep.subr.mxu0 0.0
    %172 = vmatpush1.msra.mxu0 0.0
    %173 = vmatprep.subr.mxu0 0.0
    %174 = vmatpush1.msra.mxu0 0.0
    %175 = vmatprep.subr.mxu0 0.0
    %176 = vmatpush1.msra.mxu0 0.0
    %177 = vmatprep.subr.mxu0 0.0
    %178 = vmatpush1.msra.mxu0 0.0
    %179 = vmatprep.subr.mxu0 0.0
    %180 = vmatpush1.msra.mxu0 0.0
    %181 = vmatprep.subr.mxu0 0.0
    %182 = vmatpush1.msra.mxu0 0.0
    %183 = vmatprep.subr.mxu0 0.0
    %184 = vmatpush1.msra.mxu0 0.0
    %185 = vmatprep.mubr.f32.mxu0 0.0
    %186 = vmatmul.mubr.f32.gmra.mrb[0].mxu0 %v82
    %v187 = vpop.f32.mrb[0].mxu0
    %v188 = vadd.f32 %v119, %v187
    %v189 = vpop.f32.mrb[0].mxu0
    %190 = vmatprep.mubr.f32.mxu0 0.0
    %191 = vmatmul.mubr.f32.gmra.mrb[0].mxu0 %v83
    %v192 = vpop.f32.mrb[0].mxu0
    %v193 = vadd.f32 %v119, %v192
    %v194 = vpop.f32.mrb[0].mxu0
    %195 = vmatprep.mubr.f32.mxu0 0.0
    %196 = vmatmul.mubr.f32.gmra.mrb[0].mxu0 %v84
    %v197 = vpop.f32.mrb[0].mxu0
    %v198 = vadd.f32 %v119, %v197
    %v199 = vpop.f32.mrb[0].mxu0
    %200 = vmatprep.mubr.f32.mxu0 0.0
    %201 = vmatmul.mubr.f32.gmra.mrb[0].mxu0 %v85
    %v202 = vpop.f32.mrb[0].mxu0
    %v203 = vadd.f32 %v119, %v202
    %v204 = vpop.f32.mrb[0].mxu0
    %205 = vmatprep.mubr.f32.mxu0 0.0
    %206 = vmatmul.mubr.f32.gmra.mrb[0].mxu0 %v86
    %v207 = vpop.f32.mrb[0].mxu0
    %v208 = vadd.f32 %v119, %v207
    %v209 = vpop.f32.mrb[0].mxu0
    %210 = vmatprep.mubr.f32.mxu0 0.0
    %211 = vmatmul.mubr.f32.gmra.mrb[0].mxu0 %v87
    %v212 = vpop.f32.mrb[0].mxu0
    %v213 = vadd.f32 %v119, %v212
    %v214 = vpop.f32.mrb[0].mxu0
    %215 = vmatprep.mubr.f32.mxu0 0.0
    %216 = vmatmul.mubr.f32.gmra.mrb[0].mxu0 %v88
    %v217 = vpop.f32.mrb[0].mxu0
    %v218 = vadd.f32 %v119, %v217
    %v219 = vpop.f32.mrb[0].mxu0
    %220 = vmatprep.mubr.f32.mxu0 0.0
    %221 = vmatmul.mubr.f32.gmra.mrb[0].mxu0 %v89
    %v222 = vpop.f32.mrb[0].mxu0
    %v223 = vadd.f32 %v119, %v222
    %v224 = vpop.f32.mrb[0].mxu0
    %225 = vmatprep.mubr.f32.mxu0 0.0
    %226 = vmatmul.mubr.f32.gmra.mrb[0].mxu0 %v90
    %v227 = vpop.f32.mrb[0].mxu0
    %v228 = vadd.f32 %v119, %v227
    %v229 = vpop.f32.mrb[0].mxu0
    %230 = vmatprep.mubr.f32.mxu0 0.0
    %231 = vmatmul.mubr.f32.gmra.mrb[0].mxu0 %v91
    %v232 = vpop.f32.mrb[0].mxu0
    %v233 = vadd.f32 %v119, %v232
    %v234 = vpop.f32.mrb[0].mxu0
    %235 = vmatprep.mubr.f32.mxu0 0.0
    %236 = vmatmul.mubr.f32.gmra.mrb[0].mxu0 %v92
    %v237 = vpop.f32.mrb[0].mxu0
    %v238 = vadd.f32 %v119, %v237
    %v239 = vpop.f32.mrb[0].mxu0
    %240 = vmatprep.mubr.f32.mxu0 0.0
    %241 = vmatmul.mubr.f32.gmra.mrb[0].mxu0 %v93
    %v242 = vpop.f32.mrb[0].mxu0
    %v243 = vadd.f32 %v119, %v242
    %v244 = vpop.f32.mrb[0].mxu0
    %245 = vmatprep.mubr.f32.mxu0 0.0
    %246 = vmatmul.mubr.f32.gmra.mrb[0].mxu0 %v94
    %v247 = vpop.f32.mrb[0].mxu0
    %v248 = vadd.f32 %v119, %v247
    %v249 = vpop.f32.mrb[0].mxu0
    %250 = vmatprep.mubr.f32.mxu0 0.0
    %251 = vmatmul.mubr.f32.gmra.mrb[0].mxu0 %v95
    %v252 = vpop.f32.mrb[0].mxu0
    %v253 = vadd.f32 %v119, %v252
    %v254 = vpop.f32.mrb[0].mxu0
    %255 = vmatprep.mubr.f32.mxu0 0.0
    %256 = vmatmul.mubr.f32.gmra.mrb[0].mxu0 %v96
    %v257 = vpop.f32.mrb[0].mxu0
    %v258 = vadd.f32 %v119, %v257
    %v259 = vpop.f32.mrb[0].mxu0
    %260 = vmatprep.mubr.f32.mxu0 0.0
    %261 = vmatmul.mubr.f32.gmra.mrb[0].mxu0 %v97
    %v262 = vpop.f32.mrb[0].mxu0
    %v263 = vadd.f32 %v119, %v262
    %v264 = vpop.f32.mrb[0].mxu0
    %265 = vdwg.mxu0
    %v266 = vmax.f32 %v188, 0.0
    %v267 = vmax.f32 %v193, 0.0
    %v268 = vmax.f32 %v198, 0.0
    %v269 = vmax.f32 %v203, 0.0
    %v270 = vmax.f32 %v208, 0.0
    %v271 = vmax.f32 %v213, 0.0
    %v272 = vmax.f32 %v218, 0.0
    %v273 = vmax.f32 %v223, 0.0
    %v274 = vmax.f32 %v228, 0.0
    %v275 = vmax.f32 %v233, 0.0
    %v276 = vmax.f32 %v238, 0.0
    %v277 = vmax.f32 %v243, 0.0
    %v278 = vmax.f32 %v248, 0.0
    %v279 = vmax.f32 %v253, 0.0
    %v280 = vmax.f32 %v258, 0.0
    %v281 = vmax.f32 %v263, 0.0
    %vm282 = vcmp.ne.f32.partialorder %v188, %v188
    %vm283 = vcmp.ne.f32.partialorder %v193, %v193
    %vm284 = vcmp.ne.f32.partialorder %v198, %v198
    %vm285 = vcmp.ne.f32.partialorder %v203, %v203
    %vm286 = vcmp.ne.f32.partialorder %v208, %v208
    %vm287 = vcmp.ne.f32.partialorder %v213, %v213
    %vm288 = vcmp.ne.f32.partialorder %v218, %v218
    %vm289 = vcmp.ne.f32.partialorder %v223, %v223
    %vm290 = vcmp.ne.f32.partialorder %v228, %v228
    %vm291 = vcmp.ne.f32.partialorder %v233, %v233
    %vm292 = vcmp.ne.f32.partialorder %v238, %v238
    %vm293 = vcmp.ne.f32.partialorder %v243, %v243
    %vm294 = vcmp.ne.f32.partialorder %v248, %v248
    %vm295 = vcmp.ne.f32.partialorder %v253, %v253
    %vm296 = vcmp.ne.f32.partialorder %v258, %v258
    %vm297 = vcmp.ne.f32.partialorder %v263, %v263
    %v298 = vadd.f32 %v188, 0.0
    %v299 = vadd.f32 %v193, 0.0
    %v300 = vadd.f32 %v198, 0.0
    %v301 = vadd.f32 %v203, 0.0
    %v302 = vadd.f32 %v208, 0.0
    %v303 = vadd.f32 %v213, 0.0
    %v304 = vadd.f32 %v218, 0.0
    %v305 = vadd.f32 %v223, 0.0
    %v306 = vadd.f32 %v228, 0.0
    %v307 = vadd.f32 %v233, 0.0
    %v308 = vadd.f32 %v238, 0.0
    %v309 = vadd.f32 %v243, 0.0
    %v310 = vadd.f32 %v248, 0.0
    %v311 = vadd.f32 %v253, 0.0
    %v312 = vadd.f32 %v258, 0.0
    %v313 = vadd.f32 %v263, 0.0
    %v314 = vand.u32 2147483647, %v188
    %v315 = vand.u32 2147483647, %v193
    %v316 = vand.u32 2147483647, %v198
    %v317 = vand.u32 2147483647, %v203
    %v318 = vand.u32 2147483647, %v208
    %v319 = vand.u32 2147483647, %v213
    %v320 = vand.u32 2147483647, %v218
    %v321 = vand.u32 2147483647, %v223
    %v322 = vand.u32 2147483647, %v228
    %v323 = vand.u32 2147483647, %v233
    %v324 = vand.u32 2147483647, %v238
    %v325 = vand.u32 2147483647, %v243
    %v326 = vand.u32 2147483647, %v248
    %v327 = vand.u32 2147483647, %v253
    %v328 = vand.u32 2147483647, %v258
    %v329 = vand.u32 2147483647, %v263
    %v330 = vsub.f32 0.0, %v314
    %v331 = vsub.f32 0.0, %v315
    %v332 = vsub.f32 0.0, %v316
    %v333 = vsub.f32 0.0, %v317
    %v334 = vsub.f32 0.0, %v318
    %v335 = vsub.f32 0.0, %v319
    %v336 = vsub.f32 0.0, %v320
    %v337 = vsub.f32 0.0, %v321
    %v338 = vsub.f32 0.0, %v322
    %v339 = vsub.f32 0.0, %v323
    %v340 = vsub.f32 0.0, %v324
    %v341 = vsub.f32 0.0, %v325
    %v342 = vsub.f32 0.0, %v326
    %v343 = vsub.f32 0.0, %v327
    %v344 = vsub.f32 0.0, %v328
    %v345 = vsub.f32 0.0, %v329
    %v346 = vmul.f32 %v330, 1.442695
    %v347 = vpow.pop %v346
    %v348 = vmul.f32 %v331, 1.442695
    %v349 = vpow.pop %v348
    %v350 = vmul.f32 %v332, 1.442695
    %v351 = vpow.pop %v350
    %v352 = vmul.f32 %v333, 1.442695
    %v353 = vpow.pop %v352
    %v354 = vmul.f32 %v334, 1.442695
    %v355 = vpow.pop %v354
    %v356 = vmul.f32 %v335, 1.442695
    %v357 = vpow.pop %v356
    %v358 = vmul.f32 %v336, 1.442695
    %v359 = vpow.pop %v358
    %v360 = vmul.f32 %v337, 1.442695
    %v361 = vpow.pop %v360
    %v362 = vmul.f32 %v338, 1.442695
    %v363 = vpow.pop %v362
    %v364 = vmul.f32 %v339, 1.442695
    %v365 = vpow.pop %v364
    %v366 = vmul.f32 %v340, 1.442695
    %v367 = vpow.pop %v366
    %v368 = vmul.f32 %v341, 1.442695
    %v369 = vpow.pop %v368
    %v370 = vmul.f32 %v342, 1.442695
    %v371 = vpow.pop %v370
    %v372 = vmul.f32 %v343, 1.442695
    %v373 = vpow.pop %v372
    %v374 = vmul.f32 %v344, 1.442695
    %v375 = vpow.pop %v374
    %v376 = vmul.f32 %v345, 1.442695
    %v377 = vpow.pop %v376
    %v378 = vadd.f32 %v347, 1.0
    %v379 = vlog2.pop %v378
    %v380 = vmul.f32 %v379, 0.6931472
    %v381 = vmul.f32 -0.5, %v347
    %v382 = vadd.f32 %v381, 1.0
    %v383 = vmul.f32 %v382, %v347
    %v384 = vand.u32 2147483647, %v347
    %vm385 = vcmp.lt.f32.partialorder %v384, 0.0004427343
    %v386 = vsel %vm385, %v383, %v380
    %v387 = vadd.f32 %v349, 1.0
    %v388 = vlog2.pop %v387
    %v389 = vmul.f32 %v388, 0.6931472
    %v390 = vmul.f32 -0.5, %v349
    %v391 = vadd.f32 %v390, 1.0
    %v392 = vmul.f32 %v391, %v349
    %v393 = vand.u32 2147483647, %v349
    %vm394 = vcmp.lt.f32.partialorder %v393, 0.0004427343
    %v395 = vsel %vm394, %v392, %v389
    %v396 = vadd.f32 %v351, 1.0
    %v397 = vlog2.pop %v396
    %v398 = vmul.f32 %v397, 0.6931472
    %v399 = vmul.f32 -0.5, %v351
    %v400 = vadd.f32 %v399, 1.0
    %v401 = vmul.f32 %v400, %v351
    %v402 = vand.u32 2147483647, %v351
    %vm403 = vcmp.lt.f32.partialorder %v402, 0.0004427343
    %v404 = vsel %vm403, %v401, %v398
    %v405 = vadd.f32 %v353, 1.0
    %v406 = vlog2.pop %v405
    %v407 = vmul.f32 %v406, 0.6931472
    %v408 = vmul.f32 -0.5, %v353
    %v409 = vadd.f32 %v408, 1.0
    %v410 = vmul.f32 %v409, %v353
    %v411 = vand.u32 2147483647, %v353
    %vm412 = vcmp.lt.f32.partialorder %v411, 0.0004427343
    %v413 = vsel %vm412, %v410, %v407
    %v414 = vadd.f32 %v355, 1.0
    %v415 = vlog2.pop %v414
    %v416 = vmul.f32 %v415, 0.6931472
    %v417 = vmul.f32 -0.5, %v355
    %v418 = vadd.f32 %v417, 1.0
    %v419 = vmul.f32 %v418, %v355
    %v420 = vand.u32 2147483647, %v355
    %vm421 = vcmp.lt.f32.partialorder %v420, 0.0004427343
    %v422 = vsel %vm421, %v419, %v416
    %v423 = vadd.f32 %v357, 1.0
    %v424 = vlog2.pop %v423
    %v425 = vmul.f32 %v424, 0.6931472
    %v426 = vmul.f32 -0.5, %v357
    %v427 = vadd.f32 %v426, 1.0
    %v428 = vmul.f32 %v427, %v357
    %v429 = vand.u32 2147483647, %v357
    %vm430 = vcmp.lt.f32.partialorder %v429, 0.0004427343
    %v431 = vsel %vm430, %v428, %v425
    %v432 = vadd.f32 %v359, 1.0
    %v433 = vlog2.pop %v432
    %v434 = vmul.f32 %v433, 0.6931472
    %v435 = vmul.f32 -0.5, %v359
    %v436 = vadd.f32 %v435, 1.0
    %v437 = vmul.f32 %v436, %v359
    %v438 = vand.u32 2147483647, %v359
    %vm439 = vcmp.lt.f32.partialorder %v438, 0.0004427343
    %v440 = vsel %vm439, %v437, %v434
    %v441 = vadd.f32 %v361, 1.0
    %v442 = vlog2.pop %v441
    %v443 = vmul.f32 %v442, 0.6931472
    %v444 = vmul.f32 -0.5, %v361
    %v445 = vadd.f32 %v444, 1.0
    %v446 = vmul.f32 %v445, %v361
    %v447 = vand.u32 2147483647, %v361
    %vm448 = vcmp.lt.f32.partialorder %v447, 0.0004427343
    %v449 = vsel %vm448, %v446, %v443
    %v450 = vadd.f32 %v363, 1.0
    %v451 = vlog2.pop %v450
    %v452 = vmul.f32 %v451, 0.6931472
    %v453 = vmul.f32 -0.5, %v363
    %v454 = vadd.f32 %v453, 1.0
    %v455 = vmul.f32 %v454, %v363
    %v456 = vand.u32 2147483647, %v363
    %vm457 = vcmp.lt.f32.partialorder %v456, 0.0004427343
    %v458 = vsel %vm457, %v455, %v452
    %v459 = vadd.f32 %v365, 1.0
    %v460 = vlog2.pop %v459
    %v461 = vmul.f32 %v460, 0.6931472
    %v462 = vmul.f32 -0.5, %v365
    %v463 = vadd.f32 %v462, 1.0
    %v464 = vmul.f32 %v463, %v365
    %v465 = vand.u32 2147483647, %v365
    %vm466 = vcmp.lt.f32.partialorder %v465, 0.0004427343
    %v467 = vsel %vm466, %v464, %v461
    %v468 = vadd.f32 %v367, 1.0
    %v469 = vlog2.pop %v468
    %v470 = vmul.f32 %v469, 0.6931472
    %v471 = vmul.f32 -0.5, %v367
    %v472 = vadd.f32 %v471, 1.0
    %v473 = vmul.f32 %v472, %v367
    %v474 = vand.u32 2147483647, %v367
    %vm475 = vcmp.lt.f32.partialorder %v474, 0.0004427343
    %v476 = vsel %vm475, %v473, %v470
    %v477 = vadd.f32 %v369, 1.0
    %v478 = vlog2.pop %v477
    %v479 = vmul.f32 %v478, 0.6931472
    %v480 = vmul.f32 -0.5, %v369
    %v481 = vadd.f32 %v480, 1.0
    %v482 = vmul.f32 %v481, %v369
    %v483 = vand.u32 2147483647, %v369
    %vm484 = vcmp.lt.f32.partialorder %v483, 0.0004427343
    %v485 = vsel %vm484, %v482, %v479
    %v486 = vadd.f32 %v371, 1.0
    %v487 = vlog2.pop %v486
    %v488 = vmul.f32 %v487, 0.6931472
    %v489 = vmul.f32 -0.5, %v371
    %v490 = vadd.f32 %v489, 1.0
    %v491 = vmul.f32 %v490, %v371
    %v492 = vand.u32 2147483647, %v371
    %vm493 = vcmp.lt.f32.partialorder %v492, 0.0004427343
    %v494 = vsel %vm493, %v491, %v488
    %v495 = vadd.f32 %v373, 1.0
    %v496 = vlog2.pop %v495
    %v497 = vmul.f32 %v496, 0.6931472
    %v498 = vmul.f32 -0.5, %v373
    %v499 = vadd.f32 %v498, 1.0
    %v500 = vmul.f32 %v499, %v373
    %v501 = vand.u32 2147483647, %v373
    %vm502 = vcmp.lt.f32.partialorder %v501, 0.0004427343
    %v503 = vsel %vm502, %v500, %v497
    %v504 = vadd.f32 %v375, 1.0
    %v505 = vlog2.pop %v504
    %v506 = vmul.f32 %v505, 0.6931472
    %v507 = vmul.f32 -0.5, %v375
    %v508 = vadd.f32 %v507, 1.0
    %v509 = vmul.f32 %v508, %v375
    %v510 = vand.u32 2147483647, %v375
    %vm511 = vcmp.lt.f32.partialorder %v510, 0.0004427343
    %v512 = vsel %vm511, %v509, %v506
    %v513 = vadd.f32 %v377, 1.0
    %v514 = vlog2.pop %v513
    %v515 = vmul.f32 %v514, 0.6931472
    %v516 = vmul.f32 -0.5, %v377
    %v517 = vadd.f32 %v516, 1.0
    %v518 = vmul.f32 %v517, %v377
    %v519 = vand.u32 2147483647, %v377
    %vm520 = vcmp.lt.f32.partialorder %v519, 0.0004427343
    %v521 = vsel %vm520, %v518, %v515
    %v522 = vadd.f32 %v266, %v386
    %v523 = vadd.f32 %v267, %v395
    %v524 = vadd.f32 %v268, %v404
    %v525 = vadd.f32 %v269, %v413
    %v526 = vadd.f32 %v270, %v422
    %v527 = vadd.f32 %v271, %v431
    %v528 = vadd.f32 %v272, %v440
    %v529 = vadd.f32 %v273, %v449
    %v530 = vadd.f32 %v274, %v458
    %v531 = vadd.f32 %v275, %v467
    %v532 = vadd.f32 %v276, %v476
    %v533 = vadd.f32 %v277, %v485
    %v534 = vadd.f32 %v278, %v494
    %v535 = vadd.f32 %v279, %v503
    %v536 = vadd.f32 %v280, %v512
    %v537 = vadd.f32 %v281, %v521
    %v538 = vsel %vm282, %v298, %v522
    %v539 = vsel %vm283, %v299, %v523
    %v540 = vsel %vm284, %v300, %v524
    %v541 = vsel %vm285, %v301, %v525
    %v542 = vsel %vm286, %v302, %v526
    %v543 = vsel %vm287, %v303, %v527
    %v544 = vsel %vm288, %v304, %v528
    %v545 = vsel %vm289, %v305, %v529
    %v546 = vsel %vm290, %v306, %v530
    %v547 = vsel %vm291, %v307, %v531
    %v548 = vsel %vm292, %v308, %v532
    %v549 = vsel %vm293, %v309, %v533
    %v550 = vsel %vm294, %v310, %v534
    %v551 = vsel %vm295, %v311, %v535
    %v552 = vsel %vm296, %v312, %v536
    %v553 = vsel %vm297, %v313, %v537
    %v554 = vsub.f32 %v538, 0.6931472
    %v555 = vsub.f32 %v539, 0.6931472
    %v556 = vsub.f32 %v540, 0.6931472
    %v557 = vsub.f32 %v541, 0.6931472
    %v558 = vsub.f32 %v542, 0.6931472
    %v559 = vsub.f32 %v543, 0.6931472
    %v560 = vsub.f32 %v544, 0.6931472
    %v561 = vsub.f32 %v545, 0.6931472
    %v562 = vsub.f32 %v546, 0.6931472
    %v563 = vsub.f32 %v547, 0.6931472
    %v564 = vsub.f32 %v548, 0.6931472
    %v565 = vsub.f32 %v549, 0.6931472
    %v566 = vsub.f32 %v550, 0.6931472
    %v567 = vsub.f32 %v551, 0.6931472
    %v568 = vsub.f32 %v552, 0.6931472
    %v569 = vsub.f32 %v553, 0.6931472
    %v570 = vld [vmem:[#allocation7] sm:$0xff]
    %v571 = vld [vmem:[#allocation7 + $0x8] sm:$0xff]
    %v572 = vld [vmem:[#allocation7 + $0x10] sm:$0xff]
    %v573 = vld [vmem:[#allocation7 + $0x18] sm:$0xff]
    %v574 = vld [vmem:[#allocation7 + $0x20] sm:$0xff]
    %v575 = vld [vmem:[#allocation7 + $0x28] sm:$0xff]
    %v576 = vld [vmem:[#allocation7 + $0x30] sm:$0xff]
    %v577 = vld [vmem:[#allocation7 + $0x38] sm:$0xff]
    %v578 = vld [vmem:[#allocation7 + $0x40] sm:$0xff]
    %v579 = vld [vmem:[#allocation7 + $0x48] sm:$0xff]
    %v580 = vld [vmem:[#allocation7 + $0x50] sm:$0xff]
    %v581 = vld [vmem:[#allocation7 + $0x58] sm:$0xff]
    %v582 = vld [vmem:[#allocation7 + $0x60] sm:$0xff]
    %v583 = vld [vmem:[#allocation7 + $0x68] sm:$0xff]
    %v584 = vld [vmem:[#allocation7 + $0x70] sm:$0xff]
    %v585 = vld [vmem:[#allocation7 + $0x78] sm:$0xff]
    %v586 = vld [vmem:[%s4] sm:$0x1]
    %v588 = vlaneseq
    %v589 = vshrl.u32 %v588, 7
    %v590 = vsub.s32 0, %v589
    %v591 = vrot.slane %v586, %v590
    %593 = vmatprep.subr.mxu0 0.0
    %594 = vmatpush1.msra.mxu0 %v570
    %595 = vmatprep.subr.mxu0 0.0
    %596 = vmatpush1.msra.mxu0 %v571
    %597 = vmatprep.subr.mxu0 0.0
    %598 = vmatpush1.msra.mxu0 %v572
    %599 = vmatprep.subr.mxu0 0.0
    %600 = vmatpush1.msra.mxu0 %v573
    %601 = vmatprep.subr.mxu0 0.0
    %602 = vmatpush1.msra.mxu0 %v574
    %603 = vmatprep.subr.mxu0 0.0
    %604 = vmatpush1.msra.mxu0 %v575
    %605 = vmatprep.subr.mxu0 0.0
    %606 = vmatpush1.msra.mxu0 %v576
    %607 = vmatprep.subr.mxu0 0.0
    %608 = vmatpush1.msra.mxu0 %v577
    %609 = vmatprep.subr.mxu0 0.0
    %610 = vmatpush1.msra.mxu0 %v578
    %611 = vmatprep.subr.mxu0 0.0
    %612 = vmatpush1.msra.mxu0 %v579
    %613 = vmatprep.subr.mxu0 0.0
    %614 = vmatpush1.msra.mxu0 %v580
    %615 = vmatprep.subr.mxu0 0.0
    %616 = vmatpush1.msra.mxu0 %v581
    %617 = vmatprep.subr.mxu0 0.0
    %618 = vmatpush1.msra.mxu0 %v582
    %619 = vmatprep.subr.mxu0 0.0
    %620 = vmatpush1.msra.mxu0 %v583
    %621 = vmatprep.subr.mxu0 0.0
    %622 = vmatpush1.msra.mxu0 %v584
    %623 = vmatprep.subr.mxu0 0.0
    %624 = vmatpush1.msra.mxu0 %v585
    %625 = vmatprep.subr.mxu0 0.0
    %626 = vmatpush1.msra.mxu0 0.0
    %627 = vmatprep.subr.mxu0 0.0
    %628 = vmatpush1.msra.mxu0 0.0
    %629 = vmatprep.subr.mxu0 0.0
    %630 = vmatpush1.msra.mxu0 0.0
    %631 = vmatprep.subr.mxu0 0.0
    %632 = vmatpush1.msra.mxu0 0.0
    %633 = vmatprep.subr.mxu0 0.0
    %634 = vmatpush1.msra.mxu0 0.0
    %635 = vmatprep.subr.mxu0 0.0
    %636 = vmatpush1.msra.mxu0 0.0
    %637 = vmatprep.subr.mxu0 0.0
    %638 = vmatpush1.msra.mxu0 0.0
    %639 = vmatprep.subr.mxu0 0.0
    %640 = vmatpush1.msra.mxu0 0.0
    %641 = vmatprep.subr.mxu0 0.0
    %642 = vmatpush1.msra.mxu0 0.0
    %643 = vmatprep.subr.mxu0 0.0
    %644 = vmatpush1.msra.mxu0 0.0
    %645 = vmatprep.subr.mxu0 0.0
    %646 = vmatpush1.msra.mxu0 0.0
    %647 = vmatprep.subr.mxu0 0.0
    %648 = vmatpush1.msra.mxu0 0.0
    %649 = vmatprep.subr.mxu0 0.0
    %650 = vmatpush1.msra.mxu0 0.0
    %651 = vmatprep.subr.mxu0 0.0
    %652 = vmatpush1.msra.mxu0 0.0
    %653 = vmatprep.subr.mxu0 0.0
    %654 = vmatpush1.msra.mxu0 0.0
    %655 = vmatprep.subr.mxu0 0.0
    %656 = vmatpush1.msra.mxu0 0.0
    %657 = vmatprep.mubr.f32.mxu0 0.0
    %658 = vmatmul.mubr.f32.gmra.mrb[0].mxu0 %v554
    %v659 = vpop.f32.mrb[0].mxu0
    %v660 = vadd.f32 %v591, %v659
    %v661 = vpop.f32.mrb[0].mxu0
    %662 = vmatprep.mubr.f32.mxu0 0.0
    %663 = vmatmul.mubr.f32.gmra.mrb[0].mxu0 %v555
    %v664 = vpop.f32.mrb[0].mxu0
    %v665 = vadd.f32 %v591, %v664
    %v666 = vpop.f32.mrb[0].mxu0
    %667 = vmatprep.mubr.f32.mxu0 0.0
    %668 = vmatmul.mubr.f32.gmra.mrb[0].mxu0 %v556
    %v669 = vpop.f32.mrb[0].mxu0
    %v670 = vadd.f32 %v591, %v669
    %v671 = vpop.f32.mrb[0].mxu0
    %672 = vmatprep.mubr.f32.mxu0 0.0
    %673 = vmatmul.mubr.f32.gmra.mrb[0].mxu0 %v557
    %v674 = vpop.f32.mrb[0].mxu0
    %v675 = vadd.f32 %v591, %v674
    %v676 = vpop.f32.mrb[0].mxu0
    %677 = vmatprep.mubr.f32.mxu0 0.0
    %678 = vmatmul.mubr.f32.gmra.mrb[0].mxu0 %v558
    %v679 = vpop.f32.mrb[0].mxu0
    %v680 = vadd.f32 %v591, %v679
    %v681 = vpop.f32.mrb[0].mxu0
    %682 = vmatprep.mubr.f32.mxu0 0.0
    %683 = vmatmul.mubr.f32.gmra.mrb[0].mxu0 %v559
    %v684 = vpop.f32.mrb[0].mxu0
    %v685 = vadd.f32 %v591, %v684
    %v686 = vpop.f32.mrb[0].mxu0
    %687 = vmatprep.mubr.f32.mxu0 0.0
    %688 = vmatmul.mubr.f32.gmra.mrb[0].mxu0 %v560
    %v689 = vpop.f32.mrb[0].mxu0
    %v690 = vadd.f32 %v591, %v689
    %v691 = vpop.f32.mrb[0].mxu0
    %692 = vmatprep.mubr.f32.mxu0 0.0
    %693 = vmatmul.mubr.f32.gmra.mrb[0].mxu0 %v561
    %v694 = vpop.f32.mrb[0].mxu0
    %v695 = vadd.f32 %v591, %v694
    %v696 = vpop.f32.mrb[0].mxu0
    %697 = vmatprep.mubr.f32.mxu0 0.0
    %698 = vmatmul.mubr.f32.gmra.mrb[0].mxu0 %v562
    %v699 = vpop.f32.mrb[0].mxu0
    %v700 = vadd.f32 %v591, %v699
    %v701 = vpop.f32.mrb[0].mxu0
    %702 = vmatprep.mubr.f32.mxu0 0.0
    %703 = vmatmul.mubr.f32.gmra.mrb[0].mxu0 %v563
    %v704 = vpop.f32.mrb[0].mxu0
    %v705 = vadd.f32 %v591, %v704
    %v706 = vpop.f32.mrb[0].mxu0
    %707 = vmatprep.mubr.f32.mxu0 0.0
    %708 = vmatmul.mubr.f32.gmra.mrb[0].mxu0 %v564
    %v709 = vpop.f32.mrb[0].mxu0
    %v710 = vadd.f32 %v591, %v709
    %v711 = vpop.f32.mrb[0].mxu0
    %712 = vmatprep.mubr.f32.mxu0 0.0
    %713 = vmatmul.mubr.f32.gmra.mrb[0].mxu0 %v565
    %v714 = vpop.f32.mrb[0].mxu0
    %v715 = vadd.f32 %v591, %v714
    %v716 = vpop.f32.mrb[0].mxu0
    %717 = vmatprep.mubr.f32.mxu0 0.0
    %718 = vmatmul.mubr.f32.gmra.mrb[0].mxu0 %v566
    %v719 = vpop.f32.mrb[0].mxu0
    %v720 = vadd.f32 %v591, %v719
    %v721 = vpop.f32.mrb[0].mxu0
    %722 = vmatprep.mubr.f32.mxu0 0.0
    %723 = vmatmul.mubr.f32.gmra.mrb[0].mxu0 %v567
    %v724 = vpop.f32.mrb[0].mxu0
    %v725 = vadd.f32 %v591, %v724
    %v726 = vpop.f32.mrb[0].mxu0
    %727 = vmatprep.mubr.f32.mxu0 0.0
    %728 = vmatmul.mubr.f32.gmra.mrb[0].mxu0 %v568
    %v729 = vpop.f32.mrb[0].mxu0
    %v730 = vadd.f32 %v591, %v729
    %v731 = vpop.f32.mrb[0].mxu0
    %732 = vmatprep.mubr.f32.mxu0 0.0
    %733 = vmatmul.mubr.f32.gmra.mrb[0].mxu0 %v569
    %v734 = vpop.f32.mrb[0].mxu0
    %v735 = vadd.f32 %v591, %v734
    %v736 = vpop.f32.mrb[0].mxu0
    %737 = vdwg.mxu0
    %v738 = vmax.f32 %v660, 0.0
    %v739 = vmax.f32 %v665, 0.0
    %v740 = vmax.f32 %v670, 0.0
    %v741 = vmax.f32 %v675, 0.0
    %v742 = vmax.f32 %v680, 0.0
    %v743 = vmax.f32 %v685, 0.0
    %v744 = vmax.f32 %v690, 0.0
    %v745 = vmax.f32 %v695, 0.0
    %v746 = vmax.f32 %v700, 0.0
    %v747 = vmax.f32 %v705, 0.0
    %v748 = vmax.f32 %v710, 0.0
    %v749 = vmax.f32 %v715, 0.0
    %v750 = vmax.f32 %v720, 0.0
    %v751 = vmax.f32 %v725, 0.0
    %v752 = vmax.f32 %v730, 0.0
    %v753 = vmax.f32 %v735, 0.0
    %vm754 = vcmp.ne.f32.partialorder %v660, %v660
    %vm755 = vcmp.ne.f32.partialorder %v665, %v665
    %vm756 = vcmp.ne.f32.partialorder %v670, %v670
    %vm757 = vcmp.ne.f32.partialorder %v675, %v675
    %vm758 = vcmp.ne.f32.partialorder %v680, %v680
    %vm759 = vcmp.ne.f32.partialorder %v685, %v685
    %vm760 = vcmp.ne.f32.partialorder %v690, %v690
    %vm761 = vcmp.ne.f32.partialorder %v695, %v695
    %vm762 = vcmp.ne.f32.partialorder %v700, %v700
    %vm763 = vcmp.ne.f32.partialorder %v705, %v705
    %vm764 = vcmp.ne.f32.partialorder %v710, %v710
    %vm765 = vcmp.ne.f32.partialorder %v715, %v715
    %vm766 = vcmp.ne.f32.partialorder %v720, %v720
    %vm767 = vcmp.ne.f32.partialorder %v725, %v725
    %vm768 = vcmp.ne.f32.partialorder %v730, %v730
    %vm769 = vcmp.ne.f32.partialorder %v735, %v735
    %v770 = vadd.f32 %v660, 0.0
    %v771 = vadd.f32 %v665, 0.0
    %v772 = vadd.f32 %v670, 0.0
    %v773 = vadd.f32 %v675, 0.0
    %v774 = vadd.f32 %v680, 0.0
    %v775 = vadd.f32 %v685, 0.0
    %v776 = vadd.f32 %v690, 0.0
    %v777 = vadd.f32 %v695, 0.0
    %v778 = vadd.f32 %v700, 0.0
    %v779 = vadd.f32 %v705, 0.0
    %v780 = vadd.f32 %v710, 0.0
    %v781 = vadd.f32 %v715, 0.0
    %v782 = vadd.f32 %v720, 0.0
    %v783 = vadd.f32 %v725, 0.0
    %v784 = vadd.f32 %v730, 0.0
    %v785 = vadd.f32 %v735, 0.0
    %v786 = vand.u32 2147483647, %v660
    %v787 = vand.u32 2147483647, %v665
    %v788 = vand.u32 2147483647, %v670
    %v789 = vand.u32 2147483647, %v675
    %v790 = vand.u32 2147483647, %v680
    %v791 = vand.u32 2147483647, %v685
    %v792 = vand.u32 2147483647, %v690
    %v793 = vand.u32 2147483647, %v695
    %v794 = vand.u32 2147483647, %v700
    %v795 = vand.u32 2147483647, %v705
    %v796 = vand.u32 2147483647, %v710
    %v797 = vand.u32 2147483647, %v715
    %v798 = vand.u32 2147483647, %v720
    %v799 = vand.u32 2147483647, %v725
    %v800 = vand.u32 2147483647, %v730
    %v801 = vand.u32 2147483647, %v735
    %v802 = vsub.f32 0.0, %v786
    %v803 = vsub.f32 0.0, %v787
    %v804 = vsub.f32 0.0, %v788
    %v805 = vsub.f32 0.0, %v789
    %v806 = vsub.f32 0.0, %v790
    %v807 = vsub.f32 0.0, %v791
    %v808 = vsub.f32 0.0, %v792
    %v809 = vsub.f32 0.0, %v793
    %v810 = vsub.f32 0.0, %v794
    %v811 = vsub.f32 0.0, %v795
    %v812 = vsub.f32 0.0, %v796
    %v813 = vsub.f32 0.0, %v797
    %v814 = vsub.f32 0.0, %v798
    %v815 = vsub.f32 0.0, %v799
    %v816 = vsub.f32 0.0, %v800
    %v817 = vsub.f32 0.0, %v801
    %v818 = vmul.f32 %v802, 1.442695
    %v819 = vpow.pop %v818
    %v820 = vmul.f32 %v803, 1.442695
    %v821 = vpow.pop %v820
    %v822 = vmul.f32 %v804, 1.442695
    %v823 = vpow.pop %v822
    %v824 = vmul.f32 %v805, 1.442695
    %v825 = vpow.pop %v824
    %v826 = vmul.f32 %v806, 1.442695
    %v827 = vpow.pop %v826
    %v828 = vmul.f32 %v807, 1.442695
    %v829 = vpow.pop %v828
    %v830 = vmul.f32 %v808, 1.442695
    %v831 = vpow.pop %v830
    %v832 = vmul.f32 %v809, 1.442695
    %v833 = vpow.pop %v832
    %v834 = vmul.f32 %v810, 1.442695
    %v835 = vpow.pop %v834
    %v836 = vmul.f32 %v811, 1.442695
    %v837 = vpow.pop %v836
    %v838 = vmul.f32 %v812, 1.442695
    %v839 = vpow.pop %v838
    %v840 = vmul.f32 %v813, 1.442695
    %v841 = vpow.pop %v840
    %v842 = vmul.f32 %v814, 1.442695
    %v843 = vpow.pop %v842
    %v844 = vmul.f32 %v815, 1.442695
    %v845 = vpow.pop %v844
    %v846 = vmul.f32 %v816, 1.442695
    %v847 = vpow.pop %v846
    %v848 = vmul.f32 %v817, 1.442695
    %v849 = vpow.pop %v848
    %v850 = vadd.f32 %v819, 1.0
    %v851 = vlog2.pop %v850
    %v852 = vmul.f32 %v851, 0.6931472
    %v853 = vmul.f32 -0.5, %v819
    %v854 = vadd.f32 %v853, 1.0
    %v855 = vmul.f32 %v854, %v819
    %v856 = vand.u32 2147483647, %v819
    %vm857 = vcmp.lt.f32.partialorder %v856, 0.0004427343
    %v858 = vsel %vm857, %v855, %v852
    %v859 = vadd.f32 %v821, 1.0
    %v860 = vlog2.pop %v859
    %v861 = vmul.f32 %v860, 0.6931472
    %v862 = vmul.f32 -0.5, %v821
    %v863 = vadd.f32 %v862, 1.0
    %v864 = vmul.f32 %v863, %v821
    %v865 = vand.u32 2147483647, %v821
    %vm866 = vcmp.lt.f32.partialorder %v865, 0.0004427343
    %v867 = vsel %vm866, %v864, %v861
    %v868 = vadd.f32 %v823, 1.0
    %v869 = vlog2.pop %v868
    %v870 = vmul.f32 %v869, 0.6931472
    %v871 = vmul.f32 -0.5, %v823
    %v872 = vadd.f32 %v871, 1.0
    %v873 = vmul.f32 %v872, %v823
    %v874 = vand.u32 2147483647, %v823
    %vm875 = vcmp.lt.f32.partialorder %v874, 0.0004427343
    %v876 = vsel %vm875, %v873, %v870
    %v877 = vadd.f32 %v825, 1.0
    %v878 = vlog2.pop %v877
    %v879 = vmul.f32 %v878, 0.6931472
    %v880 = vmul.f32 -0.5, %v825
    %v881 = vadd.f32 %v880, 1.0
    %v882 = vmul.f32 %v881, %v825
    %v883 = vand.u32 2147483647, %v825
    %vm884 = vcmp.lt.f32.partialorder %v883, 0.0004427343
    %v885 = vsel %vm884, %v882, %v879
    %v886 = vadd.f32 %v827, 1.0
    %v887 = vlog2.pop %v886
    %v888 = vmul.f32 %v887, 0.6931472
    %v889 = vmul.f32 -0.5, %v827
    %v890 = vadd.f32 %v889, 1.0
    %v891 = vmul.f32 %v890, %v827
    %v892 = vand.u32 2147483647, %v827
    %vm893 = vcmp.lt.f32.partialorder %v892, 0.0004427343
    %v894 = vsel %vm893, %v891, %v888
    %v895 = vadd.f32 %v829, 1.0
    %v896 = vlog2.pop %v895
    %v897 = vmul.f32 %v896, 0.6931472
    %v898 = vmul.f32 -0.5, %v829
    %v899 = vadd.f32 %v898, 1.0
    %v900 = vmul.f32 %v899, %v829
    %v901 = vand.u32 2147483647, %v829
    %vm902 = vcmp.lt.f32.partialorder %v901, 0.0004427343
    %v903 = vsel %vm902, %v900, %v897
    %v904 = vadd.f32 %v831, 1.0
    %v905 = vlog2.pop %v904
    %v906 = vmul.f32 %v905, 0.6931472
    %v907 = vmul.f32 -0.5, %v831
    %v908 = vadd.f32 %v907, 1.0
    %v909 = vmul.f32 %v908, %v831
    %v910 = vand.u32 2147483647, %v831
    %vm911 = vcmp.lt.f32.partialorder %v910, 0.0004427343
    %v912 = vsel %vm911, %v909, %v906
    %v913 = vadd.f32 %v833, 1.0
    %v914 = vlog2.pop %v913
    %v915 = vmul.f32 %v914, 0.6931472
    %v916 = vmul.f32 -0.5, %v833
    %v917 = vadd.f32 %v916, 1.0
    %v918 = vmul.f32 %v917, %v833
    %v919 = vand.u32 2147483647, %v833
    %vm920 = vcmp.lt.f32.partialorder %v919, 0.0004427343
    %v921 = vsel %vm920, %v918, %v915
    %v922 = vadd.f32 %v835, 1.0
    %v923 = vlog2.pop %v922
    %v924 = vmul.f32 %v923, 0.6931472
    %v925 = vmul.f32 -0.5, %v835
    %v926 = vadd.f32 %v925, 1.0
    %v927 = vmul.f32 %v926, %v835
    %v928 = vand.u32 2147483647, %v835
    %vm929 = vcmp.lt.f32.partialorder %v928, 0.0004427343
    %v930 = vsel %vm929, %v927, %v924
    %v931 = vadd.f32 %v837, 1.0
    %v932 = vlog2.pop %v931
    %v933 = vmul.f32 %v932, 0.6931472
    %v934 = vmul.f32 -0.5, %v837
    %v935 = vadd.f32 %v934, 1.0
    %v936 = vmul.f32 %v935, %v837
    %v937 = vand.u32 2147483647, %v837
    %vm938 = vcmp.lt.f32.partialorder %v937, 0.0004427343
    %v939 = vsel %vm938, %v936, %v933
    %v940 = vadd.f32 %v839, 1.0
    %v941 = vlog2.pop %v940
    %v942 = vmul.f32 %v941, 0.6931472
    %v943 = vmul.f32 -0.5, %v839
    %v944 = vadd.f32 %v943, 1.0
    %v945 = vmul.f32 %v944, %v839
    %v946 = vand.u32 2147483647, %v839
    %vm947 = vcmp.lt.f32.partialorder %v946, 0.0004427343
    %v948 = vsel %vm947, %v945, %v942
    %v949 = vadd.f32 %v841, 1.0
    %v950 = vlog2.pop %v949
    %v951 = vmul.f32 %v950, 0.6931472
    %v952 = vmul.f32 -0.5, %v841
    %v953 = vadd.f32 %v952, 1.0
    %v954 = vmul.f32 %v953, %v841
    %v955 = vand.u32 2147483647, %v841
    %vm956 = vcmp.lt.f32.partialorder %v955, 0.0004427343
    %v957 = vsel %vm956, %v954, %v951
    %v958 = vadd.f32 %v843, 1.0
    %v959 = vlog2.pop %v958
    %v960 = vmul.f32 %v959, 0.6931472
    %v961 = vmul.f32 -0.5, %v843
    %v962 = vadd.f32 %v961, 1.0
    %v963 = vmul.f32 %v962, %v843
    %v964 = vand.u32 2147483647, %v843
    %vm965 = vcmp.lt.f32.partialorder %v964, 0.0004427343
    %v966 = vsel %vm965, %v963, %v960
    %v967 = vadd.f32 %v845, 1.0
    %v968 = vlog2.pop %v967
    %v969 = vmul.f32 %v968, 0.6931472
    %v970 = vmul.f32 -0.5, %v845
    %v971 = vadd.f32 %v970, 1.0
    %v972 = vmul.f32 %v971, %v845
    %v973 = vand.u32 2147483647, %v845
    %vm974 = vcmp.lt.f32.partialorder %v973, 0.0004427343
    %v975 = vsel %vm974, %v972, %v969
    %v976 = vadd.f32 %v847, 1.0
    %v977 = vlog2.pop %v976
    %v978 = vmul.f32 %v977, 0.6931472
    %v979 = vmul.f32 -0.5, %v847
    %v980 = vadd.f32 %v979, 1.0
    %v981 = vmul.f32 %v980, %v847
    %v982 = vand.u32 2147483647, %v847
    %vm983 = vcmp.lt.f32.partialorder %v982, 0.0004427343
    %v984 = vsel %vm983, %v981, %v978
    %v985 = vadd.f32 %v849, 1.0
    %v986 = vlog2.pop %v985
    %v987 = vmul.f32 %v986, 0.6931472
    %v988 = vmul.f32 -0.5, %v849
    %v989 = vadd.f32 %v988, 1.0
    %v990 = vmul.f32 %v989, %v849
    %v991 = vand.u32 2147483647, %v849
    %vm992 = vcmp.lt.f32.partialorder %v991, 0.0004427343
    %v993 = vsel %vm992, %v990, %v987
    %v994 = vadd.f32 %v738, %v858
    %v995 = vadd.f32 %v739, %v867
    %v996 = vadd.f32 %v740, %v876
    %v997 = vadd.f32 %v741, %v885
    %v998 = vadd.f32 %v742, %v894
    %v999 = vadd.f32 %v743, %v903
    %v1000 = vadd.f32 %v744, %v912
    %v1001 = vadd.f32 %v745, %v921
    %v1002 = vadd.f32 %v746, %v930
    %v1003 = vadd.f32 %v747, %v939
    %v1004 = vadd.f32 %v748, %v948
    %v1005 = vadd.f32 %v749, %v957
    %v1006 = vadd.f32 %v750, %v966
    %v1007 = vadd.f32 %v751, %v975
    %v1008 = vadd.f32 %v752, %v984
    %v1009 = vadd.f32 %v753, %v993
    %v1010 = vsel %vm754, %v770, %v994
    %v1011 = vsel %vm755, %v771, %v995
    %v1012 = vsel %vm756, %v772, %v996
    %v1013 = vsel %vm757, %v773, %v997
    %v1014 = vsel %vm758, %v774, %v998
    %v1015 = vsel %vm759, %v775, %v999
    %v1016 = vsel %vm760, %v776, %v1000
    %v1017 = vsel %vm761, %v777, %v1001
    %v1018 = vsel %vm762, %v778, %v1002
    %v1019 = vsel %vm763, %v779, %v1003
    %v1020 = vsel %vm764, %v780, %v1004
    %v1021 = vsel %vm765, %v781, %v1005
    %v1022 = vsel %vm766, %v782, %v1006
    %v1023 = vsel %vm767, %v783, %v1007
    %v1024 = vsel %vm768, %v784, %v1008
    %v1025 = vsel %vm769, %v785, %v1009
    %v1026 = vsub.f32 %v1010, 0.6931472
    %v1027 = vsub.f32 %v1011, 0.6931472
    %v1028 = vsub.f32 %v1012, 0.6931472
    %v1029 = vsub.f32 %v1013, 0.6931472
    %v1030 = vsub.f32 %v1014, 0.6931472
    %v1031 = vsub.f32 %v1015, 0.6931472
    %v1032 = vsub.f32 %v1016, 0.6931472
    %v1033 = vsub.f32 %v1017, 0.6931472
    %v1034 = vsub.f32 %v1018, 0.6931472
    %v1035 = vsub.f32 %v1019, 0.6931472
    %v1036 = vsub.f32 %v1020, 0.6931472
    %v1037 = vsub.f32 %v1021, 0.6931472
    %v1038 = vsub.f32 %v1022, 0.6931472
    %v1039 = vsub.f32 %v1023, 0.6931472
    %v1040 = vsub.f32 %v1024, 0.6931472
    %v1041 = vsub.f32 %v1025, 0.6931472
    %v1042 = vld [vmem:[#allocation8] sm:$0xff]
    %v1043 = vld [vmem:[#allocation8 + $0x8] sm:$0xff]
    %v1044 = vld [vmem:[#allocation8 + $0x10] sm:$0xff]
    %v1045 = vld [vmem:[#allocation8 + $0x18] sm:$0xff]
    %v1046 = vld [vmem:[#allocation8 + $0x20] sm:$0xff]
    %v1047 = vld [vmem:[#allocation8 + $0x28] sm:$0xff]
    %v1048 = vld [vmem:[#allocation8 + $0x30] sm:$0xff]
    %v1049 = vld [vmem:[#allocation8 + $0x38] sm:$0xff]
    %v1050 = vld [vmem:[#allocation8 + $0x40] sm:$0xff]
    %v1051 = vld [vmem:[#allocation8 + $0x48] sm:$0xff]
    %v1052 = vld [vmem:[#allocation8 + $0x50] sm:$0xff]
    %v1053 = vld [vmem:[#allocation8 + $0x58] sm:$0xff]
    %v1054 = vld [vmem:[#allocation8 + $0x60] sm:$0xff]
    %v1055 = vld [vmem:[#allocation8 + $0x68] sm:$0xff]
    %v1056 = vld [vmem:[#allocation8 + $0x70] sm:$0xff]
    %v1057 = vld [vmem:[#allocation8 + $0x78] sm:$0xff]
    %v1058 = vld [vmem:[%s6] sm:$0x1]
    %v1060 = vlaneseq
    %v1061 = vshrl.u32 %v1060, 7
    %v1062 = vsub.s32 0, %v1061
    %v1063 = vrot.slane %v1058, %v1062
    %1065 = vmatprep.subr.mxu0 0.0
    %1066 = vmatpush1.msra.mxu0 %v1042
    %1067 = vmatprep.subr.mxu0 0.0
    %1068 = vmatpush1.msra.mxu0 %v1043
    %1069 = vmatprep.subr.mxu0 0.0
    %1070 = vmatpush1.msra.mxu0 %v1044
    %1071 = vmatprep.subr.mxu0 0.0
    %1072 = vmatpush1.msra.mxu0 %v1045
    %1073 = vmatprep.subr.mxu0 0.0
    %1074 = vmatpush1.msra.mxu0 %v1046
    %1075 = vmatprep.subr.mxu0 0.0
    %1076 = vmatpush1.msra.mxu0 %v1047
    %1077 = vmatprep.subr.mxu0 0.0
    %1078 = vmatpush1.msra.mxu0 %v1048
    %1079 = vmatprep.subr.mxu0 0.0
    %1080 = vmatpush1.msra.mxu0 %v1049
    %1081 = vmatprep.subr.mxu0 0.0
    %1082 = vmatpush1.msra.mxu0 %v1050
    %1083 = vmatprep.subr.mxu0 0.0
    %1084 = vmatpush1.msra.mxu0 %v1051
    %1085 = vmatprep.subr.mxu0 0.0
    %1086 = vmatpush1.msra.mxu0 %v1052
    %1087 = vmatprep.subr.mxu0 0.0
    %1088 = vmatpush1.msra.mxu0 %v1053
    %1089 = vmatprep.subr.mxu0 0.0
    %1090 = vmatpush1.msra.mxu0 %v1054
    %1091 = vmatprep.subr.mxu0 0.0
    %1092 = vmatpush1.msra.mxu0 %v1055
    %1093 = vmatprep.subr.mxu0 0.0
    %1094 = vmatpush1.msra.mxu0 %v1056
    %1095 = vmatprep.subr.mxu0 0.0
    %1096 = vmatpush1.msra.mxu0 %v1057
    %1097 = vmatprep.subr.mxu0 0.0
    %1098 = vmatpush1.msra.mxu0 0.0
    %1099 = vmatprep.subr.mxu0 0.0
    %1100 = vmatpush1.msra.mxu0 0.0
    %1101 = vmatprep.subr.mxu0 0.0
    %1102 = vmatpush1.msra.mxu0 0.0
    %1103 = vmatprep.subr.mxu0 0.0
    %1104 = vmatpush1.msra.mxu0 0.0
    %1105 = vmatprep.subr.mxu0 0.0
    %1106 = vmatpush1.msra.mxu0 0.0
    %1107 = vmatprep.subr.mxu0 0.0
    %1108 = vmatpush1.msra.mxu0 0.0
    %1109 = vmatprep.subr.mxu0 0.0
    %1110 = vmatpush1.msra.mxu0 0.0
    %1111 = vmatprep.subr.mxu0 0.0
    %1112 = vmatpush1.msra.mxu0 0.0
    %1113 = vmatprep.subr.mxu0 0.0
    %1114 = vmatpush1.msra.mxu0 0.0
    %1115 = vmatprep.subr.mxu0 0.0
    %1116 = vmatpush1.msra.mxu0 0.0
    %1117 = vmatprep.subr.mxu0 0.0
    %1118 = vmatpush1.msra.mxu0 0.0
    %1119 = vmatprep.subr.mxu0 0.0
    %1120 = vmatpush1.msra.mxu0 0.0
    %1121 = vmatprep.subr.mxu0 0.0
    %1122 = vmatpush1.msra.mxu0 0.0
    %1123 = vmatprep.subr.mxu0 0.0
    %1124 = vmatpush1.msra.mxu0 0.0
    %1125 = vmatprep.subr.mxu0 0.0
    %1126 = vmatpush1.msra.mxu0 0.0
    %1127 = vmatprep.subr.mxu0 0.0
    %1128 = vmatpush1.msra.mxu0 0.0
    %1129 = vmatprep.mubr.f32.mxu0 0.0
    %1130 = vmatmul.mubr.f32.gmra.mrb[0].mxu0 %v1026
    %v1131 = vpop.f32.mrb[0].mxu0
    %v1132 = vadd.f32 %v1063, %v1131
    %v1133 = vpop.f32.mrb[0].mxu0
    %1134 = vmatprep.mubr.f32.mxu0 0.0
    %1135 = vmatmul.mubr.f32.gmra.mrb[0].mxu0 %v1027
    %v1136 = vpop.f32.mrb[0].mxu0
    %v1137 = vadd.f32 %v1063, %v1136
    %v1138 = vpop.f32.mrb[0].mxu0
    %1139 = vmatprep.mubr.f32.mxu0 0.0
    %1140 = vmatmul.mubr.f32.gmra.mrb[0].mxu0 %v1028
    %v1141 = vpop.f32.mrb[0].mxu0
    %v1142 = vadd.f32 %v1063, %v1141
    %v1143 = vpop.f32.mrb[0].mxu0
    %1144 = vmatprep.mubr.f32.mxu0 0.0
    %1145 = vmatmul.mubr.f32.gmra.mrb[0].mxu0 %v1029
    %v1146 = vpop.f32.mrb[0].mxu0
    %v1147 = vadd.f32 %v1063, %v1146
    %v1148 = vpop.f32.mrb[0].mxu0
    %1149 = vmatprep.mubr.f32.mxu0 0.0
    %1150 = vmatmul.mubr.f32.gmra.mrb[0].mxu0 %v1030
    %v1151 = vpop.f32.mrb[0].mxu0
    %v1152 = vadd.f32 %v1063, %v1151
    %v1153 = vpop.f32.mrb[0].mxu0
    %1154 = vmatprep.mubr.f32.mxu0 0.0
    %1155 = vmatmul.mubr.f32.gmra.mrb[0].mxu0 %v1031
    %v1156 = vpop.f32.mrb[0].mxu0
    %v1157 = vadd.f32 %v1063, %v1156
    %v1158 = vpop.f32.mrb[0].mxu0
    %1159 = vmatprep.mubr.f32.mxu0 0.0
    %1160 = vmatmul.mubr.f32.gmra.mrb[0].mxu0 %v1032
    %v1161 = vpop.f32.mrb[0].mxu0
    %v1162 = vadd.f32 %v1063, %v1161
    %v1163 = vpop.f32.mrb[0].mxu0
    %1164 = vmatprep.mubr.f32.mxu0 0.0
    %1165 = vmatmul.mubr.f32.gmra.mrb[0].mxu0 %v1033
    %v1166 = vpop.f32.mrb[0].mxu0
    %v1167 = vadd.f32 %v1063, %v1166
    %v1168 = vpop.f32.mrb[0].mxu0
    %1169 = vmatprep.mubr.f32.mxu0 0.0
    %1170 = vmatmul.mubr.f32.gmra.mrb[0].mxu0 %v1034
    %v1171 = vpop.f32.mrb[0].mxu0
    %v1172 = vadd.f32 %v1063, %v1171
    %v1173 = vpop.f32.mrb[0].mxu0
    %1174 = vmatprep.mubr.f32.mxu0 0.0
    %1175 = vmatmul.mubr.f32.gmra.mrb[0].mxu0 %v1035
    %v1176 = vpop.f32.mrb[0].mxu0
    %v1177 = vadd.f32 %v1063, %v1176
    %v1178 = vpop.f32.mrb[0].mxu0
    %1179 = vmatprep.mubr.f32.mxu0 0.0
    %1180 = vmatmul.mubr.f32.gmra.mrb[0].mxu0 %v1036
    %v1181 = vpop.f32.mrb[0].mxu0
    %v1182 = vadd.f32 %v1063, %v1181
    %v1183 = vpop.f32.mrb[0].mxu0
    %1184 = vmatprep.mubr.f32.mxu0 0.0
    %1185 = vmatmul.mubr.f32.gmra.mrb[0].mxu0 %v1037
    %v1186 = vpop.f32.mrb[0].mxu0
    %v1187 = vadd.f32 %v1063, %v1186
    %v1188 = vpop.f32.mrb[0].mxu0
    %1189 = vmatprep.mubr.f32.mxu0 0.0
    %1190 = vmatmul.mubr.f32.gmra.mrb[0].mxu0 %v1038
    %v1191 = vpop.f32.mrb[0].mxu0
    %v1192 = vadd.f32 %v1063, %v1191
    %v1193 = vpop.f32.mrb[0].mxu0
    %1194 = vmatprep.mubr.f32.mxu0 0.0
    %1195 = vmatmul.mubr.f32.gmra.mrb[0].mxu0 %v1039
    %v1196 = vpop.f32.mrb[0].mxu0
    %v1197 = vadd.f32 %v1063, %v1196
    %v1198 = vpop.f32.mrb[0].mxu0
    %1199 = vmatprep.mubr.f32.mxu0 0.0
    %1200 = vmatmul.mubr.f32.gmra.mrb[0].mxu0 %v1040
    %v1201 = vpop.f32.mrb[0].mxu0
    %v1202 = vadd.f32 %v1063, %v1201
    %v1203 = vpop.f32.mrb[0].mxu0
    %1204 = vmatprep.mubr.f32.mxu0 0.0
    %1205 = vmatmul.mubr.f32.gmra.mrb[0].mxu0 %v1041
    %v1206 = vpop.f32.mrb[0].mxu0
    %v1207 = vadd.f32 %v1063, %v1206
    %v1208 = vpop.f32.mrb[0].mxu0
    %1209 = vdwg.mxu0
    %1210 = vxpose.xlu0.b32.start [1/16] %v1132, 128
    %1211 = vxpose.xlu0.b32.cont [2/16] %v1137, 128
    %1212 = vxpose.xlu0.b32.cont [3/16] %v1142, 128
    %1213 = vxpose.xlu0.b32.cont [4/16] %v1147, 128
    %1214 = vxpose.xlu0.b32.cont [5/16] %v1152, 128
    %1215 = vxpose.xlu0.b32.cont [6/16] %v1157, 128
    %1216 = vxpose.xlu0.b32.cont [7/16] %v1162, 128
    %1217 = vxpose.xlu0.b32.cont [8/16] %v1167, 128
    %1218 = vxpose.xlu0.b32.cont [9/16] %v1172, 128
    %1219 = vxpose.xlu0.b32.cont [10/16] %v1177, 128
    %1220 = vxpose.xlu0.b32.cont [11/16] %v1182, 128
    %1221 = vxpose.xlu0.b32.cont [12/16] %v1187, 128
    %1222 = vxpose.xlu0.b32.cont [13/16] %v1192, 128
    %1223 = vxpose.xlu0.b32.cont [14/16] %v1197, 128
    %1224 = vxpose.xlu0.b32.cont [15/16] %v1202, 128
    %1225 = vxpose.xlu0.b32.end [16/16] %v1207, 128
    %v1226 = vpop.trf.xlu0
    %v1227 = vpop.trf.xlu0
    %v1228 = vpop.trf.xlu0
    %v1229 = vpop.trf.xlu0
    %v1230 = vpop.trf.xlu0
    %v1231 = vpop.trf.xlu0
    %v1232 = vpop.trf.xlu0
    %v1233 = vpop.trf.xlu0
    %v1234 = vpop.trf.xlu0
    %v1235 = vpop.trf.xlu0
    %v1236 = vpop.trf.xlu0
    %v1237 = vpop.trf.xlu0
    %v1238 = vpop.trf.xlu0
    %v1239 = vpop.trf.xlu0
    %v1240 = vpop.trf.xlu0
    %v1241 = vpop.trf.xlu0
    %1242 = vst [vmem:[#allocation10] sm:$0xff] %v1226
    // Predicated region
    $region46: #{tpu_custom_call.1} parent=1 // pred_check
      _
    $region47: #{tpu_custom_call.1} parent=1 // pred_check_branch
      %1244 = sbr.rel (0) target = $region49
    $region48: #{tpu_custom_call.1} parent=1 // pred_region
      %s1246 = ssub.s32 128, 128
      %1247 = vsyncadd [#allocation4], %s1246
      %s1249 = sshll.u32 [#allocation10], 4
      %s1250 = int_to_ptr.vmem [resolvable:$true] %s1249
      %1252 = dma.vmem_to_hbm [thread:$0]  %s1250, 128, %s7, [#allocation4]
    $region49: #{tpu_custom_call.1} parent=1 // pred_fallthru
      _
    // Predicated region
    $region50: #{tpu_custom_call.1} parent=1 // pred_check
      _
    $region51: #{tpu_custom_call.1} parent=1 // pred_check_branch
      %1254 = sbr.rel (0) target = $region53
    $region52: #{tpu_custom_call.1} parent=1 // pred_region
      %1255 = dma.done [#allocation4], 128
    $region53: #{tpu_custom_call.1} parent=1 // pred_fallthru
      _
    %1256 = vsyncpa [#allocation3], 1
    %1257 = vsyncpa [#allocation6], 1
    %1258 = vsyncpa [#allocation9], 1
    %1259 = vsyncpa [#allocation4], 1

</llo_original>
